<compile_context>
chip_gen: v7x
topology: tpu7x:2x2x1
jax: 0.10.0
libtpu: 0.0.40
codegen_flags: <defaults>
</compile_context>

<pallas_src>
import math

import jax
import jax.numpy as jnp
from jax import lax
from jax.experimental import pallas as pl
from jax.experimental.pallas import tpu as pltpu

_LN_EPS = 1e-5


# ---------------------------------------------------------------------------
# Per-device-kind VMEM budget (0.8 x detected capacity, cached per kind).
# ---------------------------------------------------------------------------
_VMEM_LIMITS = {}


def _vmem_limit_bytes():
    try:
        kind = jax.devices()[0].device_kind
    except Exception:
        kind = "unknown"
    if kind not in _VMEM_LIMITS:
        try:
            cap = pltpu.get_tpu_info().vmem_capacity_bytes
        except Exception:
            cap = 64 * 1024 * 1024            # conservative: v7x per-core VMEM
        _VMEM_LIMITS[kind] = int(cap * 0.8)   # headroom for Mosaic scratch
    return _VMEM_LIMITS[kind]


def _compiler_params():
    return pltpu.CompilerParams(
        dimension_semantics=("parallel",),
        vmem_limit_bytes=_vmem_limit_bytes())


# ---------------------------------------------------------------------------
# Single-buffered grid-invariant operands (weights / biases / mask), with a
# one-time runtime probe so the script still runs on jax builds that do not
# accept BlockSpec(pipeline_mode=...).
# ---------------------------------------------------------------------------
def _probe_copy_kernel(x_ref, o_ref):
    o_ref[...] = x_ref[...]


_SINGLE_BUF = None


def _use_single_buffer():
    global _SINGLE_BUF
    if _SINGLE_BUF is None:
        ok = False
        if hasattr(pl, "Buffered"):
            try:
                spec = pl.BlockSpec((8, 128), lambda i: (0, 0),
                                    pipeline_mode=pl.Buffered(1))
                fn = pl.pallas_call(
                    _probe_copy_kernel,
                    out_shape=jax.ShapeDtypeStruct((8, 128), jnp.float32),
                    grid=(1,),
                    in_specs=[spec],
                    out_specs=pl.BlockSpec((8, 128), lambda i: (0, 0)))
                jax.block_until_ready(fn(jnp.zeros((8, 128), jnp.float32)))
                ok = True
            except Exception:
                ok = False
        _SINGLE_BUF = ok
    return _SINGLE_BUF


def _const_spec(shape):
    """Full-array block with a constant index_map; single-buffered when the
    installed Pallas supports it (their block index never changes, so double
    buffering them is pure VMEM waste)."""
    nd = len(shape)
    imap = lambda *_: (0,) * nd
    if _use_single_buffer():
        return pl.BlockSpec(tuple(shape), imap, pipeline_mode=pl.Buffered(1))
    return pl.BlockSpec(tuple(shape), imap)


def _pick_row_tile(nrows):
    # Robust tile selection: grids use pl.cdiv, so TR stays large for CLIP
    # sequence lengths (L = 77 / 197 / 257) instead of collapsing to tiny
    # divisors.  256 rows fully feed the 256-deep MXU on v6e/v7x.
    # TODO(synk): sweep TR=512 on v6e (128 MiB VMEM headroom).
    return nrows if nrows <= 256 else 256


# ---------------------------------------------------------------------------
# Kernels
# ---------------------------------------------------------------------------
def _ln_qkv_kernel(x_ref, w_ref, b_ref, wqkv_ref, bqkv_ref, qkv_ref):
    """LayerNorm (f32 stats) + fused QKV projection for a tile of token rows."""
    x = x_ref[...].astype(jnp.float32)                        # (TR, E)
    u = jnp.mean(x, axis=-1, keepdims=True)
    s = jnp.mean((x - u) ** 2, axis=-1, keepdims=True)
    h = (x - u) * lax.rsqrt(s + _LN_EPS)
    h = h * w_ref[...] + b_ref[...]                           # (1, E) broadcast
    qkv = jnp.dot(h.astype(wqkv_ref.dtype), wqkv_ref[...],
                  preferred_element_type=jnp.float32) + bqkv_ref[...]
    qkv_ref[...] = qkv.astype(qkv_ref.dtype)                  # (TR, 3E)


def _make_mha_kernel(n_head, has_mask):
    """Per-batch multi-head attention on the fused qkv tile.

    Heads are sliced as 64(-ish)-wide column windows of the (L, 3E) VMEM tile,
    scores contract head_dim via dot_general (no K transpose in HBM), softmax
    statistics stay in f32 and normalization is deferred to one reciprocal
    after PV.  The merged (L, E) context is written lane-dense."""
    def mha_kernel(*refs):
        if has_mask:
            qkv_ref, mask_ref, o_ref = refs
        else:
            qkv_ref, o_ref = refs
            mask_ref = None
        L, three_e = qkv_ref.shape
        E = three_e // 3
        hd = E // n_head
        for h in range(n_head):                               # static unroll
            q = qkv_ref[:, pl.ds(h * hd, hd)]                 # (L, hd) bf16
            k = qkv_ref[:, pl.ds(E + h * hd, hd)]             # (L, hd)
            v = qkv_ref[:, pl.ds(2 * E + h * hd, hd)]         # (L, hd)
            s = lax.dot_general(q, k, (((1,), (1,)), ((), ())),
                                preferred_element_type=jnp.float32)   # (L, L)
            if mask_ref is not None:
                s = s + mask_ref[...]                          # additive mask
            m = jnp.max(s, axis=-1, keepdims=True)
            p = jnp.exp(s - m)                                 # unnormalized
            l = jnp.sum(p, axis=-1, keepdims=True)
            o = jnp.dot(p.astype(v.dtype), v,
                        preferred_element_type=jnp.float32)    # (L, hd)
            o_ref[:, pl.ds(h * hd, hd)] = (
                o * pl.reciprocal(l, approx=True)).astype(o_ref.dtype)
    return mha_kernel


def _proj_mlp_kernel(x_ref, a_ref, wo_ref, bo_ref, ln2w_ref, ln2b_ref,
                     wfc_ref, bfc_ref, wpj_ref, bpj_ref, o_ref):
    """Attention out-proj + residual, then LN2 + MLP(QuickGELU) + residual."""
    x = x_ref[...].astype(jnp.float32)                        # (TR, E) residual
    x = x + jnp.dot(a_ref[...], wo_ref[...],
                    preferred_element_type=jnp.float32) + bo_ref[...]
    u = jnp.mean(x, axis=-1, keepdims=True)
    s = jnp.mean((x - u) ** 2, axis=-1, keepdims=True)
    h = (x - u) * lax.rsqrt(s + _LN_EPS)
    h = h * ln2w_ref[...] + ln2b_ref[...]
    ff = jnp.dot(h.astype(wfc_ref.dtype), wfc_ref[...],
                 preferred_element_type=jnp.float32) + bfc_ref[...]
    ff = ff * jax.nn.sigmoid(1.702 * ff)                      # QuickGELU (f32)
    y = x + jnp.dot(ff.astype(wpj_ref.dtype), wpj_ref[...],
                    preferred_element_type=jnp.float32) + bpj_ref[...]
    o_ref[...] = y.astype(o_ref.dtype)


# ---------------------------------------------------------------------------
# One residual attention block = 3 pallas_calls (reshapes between them are
# free, contiguous views).
# ---------------------------------------------------------------------------
def run_resblock(x_nle, p, n_head, attn_mask=None):
    """x_nle: (N, L, E) float32.  p: prepared parameter dict for this block."""
    N, L, E = x_nle.shape
    H = n_head
    R = N * L
    TR = _pick_row_tile(R)
    wdt = p['w_qkv'].dtype
    wb = jnp.dtype(wdt).itemsize

    xr = x_nle.reshape(R, E)
    row_grid = (pl.cdiv(R, TR),)

    def row_spec(width):
        return pl.BlockSpec((TR, width), lambda i: (i, 0))

    # ---- K1: LN1 + fused QKV projection (token-parallel) -------------------
    qkv = pl.pallas_call(
        _ln_qkv_kernel,
        out_shape=jax.ShapeDtypeStruct((R, 3 * E), wdt),
        grid=row_grid,
        in_specs=[row_spec(E),
                  _const_spec((1, E)), _const_spec((1, E)),
                  _const_spec((E, 3 * E)), _const_spec((1, 3 * E))],
        out_specs=row_spec(3 * E),
        compiler_params=_compiler_params(),
        cost_estimate=pl.CostEstimate(
            flops=int(6 * R * E * E),
            transcendentals=int(R),
            bytes_accessed=int(4 * R * E + 3 * E * E * wb + 3 * R * E * wb)),
    )(xr, p['ln1_w'], p['ln1_b'], p['w_qkv'], p['b_qkv'])

    # ---- K2: per-batch multi-head attention ---------------------------------
    qkv3 = qkv.reshape(N, L, 3 * E)                 # free view of K1's output
    in_specs = [pl.BlockSpec((None, L, 3 * E), lambda n: (n, 0, 0))]
    operands = [qkv3]
    if attn_mask is not None:
        in_specs.append(_const_spec((L, L)))
        operands.append(attn_mask.astype(jnp.float32))
    attn = pl.pallas_call(
        _make_mha_kernel(H, attn_mask is not None),
        out_shape=jax.ShapeDtypeStruct((N, L, E), wdt),
        grid=(N,),
        in_specs=in_specs,
        out_specs=pl.BlockSpec((None, L, E), lambda n: (n, 0, 0)),
        compiler_params=_compiler_params(),
        cost_estimate=pl.CostEstimate(
            flops=int(4 * N * L * L * E),
            transcendentals=int(N * H * L * L),
            bytes_accessed=int(4 * N * L * E * wb)),
    )(*operands)
    attn_r = attn.reshape(R, E)                     # free view

    # ---- K3: out-proj + residual + LN2 + MLP + residual (token-parallel) ----
    y = pl.pallas_call(
        _proj_mlp_kernel,
        out_shape=jax.ShapeDtypeStruct((R, E), jnp.float32),
        grid=row_grid,
        in_specs=[row_spec(E), row_spec(E),
                  _const_spec((E, E)), _const_spec((1, E)),
                  _const_spec((1, E)), _const_spec((1, E)),
                  _const_spec((E, 4 * E)), _const_spec((1, 4 * E)),
                  _const_spec((4 * E, E)), _const_spec((1, E))],
        out_specs=row_spec(E),
        compiler_params=_compiler_params(),
        cost_estimate=pl.CostEstimate(
            flops=int(18 * R * E * E),
            transcendentals=int(4 * R * E + R),
            bytes_accessed=int(8 * R * E + R * E * wb + 9 * E * E * wb)),
    )(xr, attn_r, p['w_o'], p['b_o'], p['ln2_w'], p['ln2_b'],
      p['w_fc'], p['b_fc'], p['w_pj'], p['b_pj'])

    return y.reshape(N, L, E)


def transformer_forward(x_lne, prepared_params, n_head, attn_mask=None):
    """Same convention as the torch module: x is (L, N, E), seq-first."""
    x = jnp.transpose(x_lne, (1, 0, 2)).astype(jnp.float32)   # (N, L, E)
    for p in prepared_params:
        x = run_resblock(x, p, n_head, attn_mask=attn_mask)
    return jnp.transpose(x, (1, 0, 2))                        # (L, N, E)


# ---------------------------------------------------------------------------
# Parameters: synthetic torch-layout init + conversion to kernel layout.
# ---------------------------------------------------------------------------
def init_raw_params(key, width, layers):
    """Deterministic synthetic parameters in the torch nn.Module layout."""
    E = width
    params = []
    for i in range(layers):
        ks = jax.random.split(jax.random.fold_in(key, i), 4)
        params.append(dict(
            ln1_w=jnp.ones((E,), jnp.float32),
            ln1_b=jnp.zeros((E,), jnp.float32),
            w_qkv=0.02 * jax.random.normal(ks[0], (3 * E, E), jnp.float32),
            b_qkv=jnp.zeros((3 * E,), jnp.float32),
            w_o=0.02 * jax.random.normal(ks[1], (E, E), jnp.float32),
            b_o=jnp.zeros((E,), jnp.float32),
            ln2_w=jnp.ones((E,), jnp.float32),
            ln2_b=jnp.zeros((E,), jnp.float32),
            w_fc=0.02 * jax.random.normal(ks[2], (4 * E, E), jnp.float32),
            b_fc=jnp.zeros((4 * E,), jnp.float32),
            w_pj=0.02 * jax.random.normal(ks[3], (E, 4 * E), jnp.float32),
            b_pj=jnp.zeros((E,), jnp.float32),
        ))
    return params


def prepare_params(raw, n_head, weight_dtype=jnp.bfloat16):
    """torch layout -> kernel layout: pre-transposed right-multiply weights
    (bf16), f32 biases / LN params, 1/sqrt(head_dim) folded into the Q proj."""
    E = raw['w_o'].shape[0]
    assert E % n_head == 0, "d_model must be divisible by n_head"
    hd = E // n_head
    scale = 1.0 / math.sqrt(hd)
    qscale = jnp.concatenate([jnp.full((E,), scale, jnp.float32),
                              jnp.ones((2 * E,), jnp.float32)])
    w_qkv = raw['w_qkv'].T * qscale[None, :]       # (E, 3E), Q cols pre-scaled
    b_qkv = raw['b_qkv'] * qscale
    f32 = jnp.float32
    return dict(
        ln1_w=raw['ln1_w'].reshape(1, E).astype(f32),
        ln1_b=raw['ln1_b'].reshape(1, E).astype(f32),
        w_qkv=w_qkv.astype(weight_dtype),
        b_qkv=b_qkv.reshape(1, 3 * E).astype(f32),
        w_o=raw['w_o'].T.astype(weight_dtype),     # (E, E)
        b_o=raw['b_o'].reshape(1, E).astype(f32),
        ln2_w=raw['ln2_w'].reshape(1, E).astype(f32),
        ln2_b=raw['ln2_b'].reshape(1, E).astype(f32),
        w_fc=raw['w_fc'].T.astype(weight_dtype),   # (E, 4E)
        b_fc=raw['b_fc'].reshape(1, 4 * E).astype(f32),
        w_pj=raw['w_pj'].T.astype(weight_dtype),   # (4E, E)
        b_pj=raw['b_pj'].reshape(1, E).astype(f32),
    )


# ---------------------------------------------------------------------------
# Pure-JAX reference (f32, same prepared weights) for a sanity check.
# ---------------------------------------------------------------------------
def reference_forward(x_lne, prepared_params, n_head, attn_mask=None):
    def ln(v, w, b):
        u = jnp.mean(v, -1, keepdims=True)
        s = jnp.mean((v - u) ** 2, -1, keepdims=True)
        return w * ((v - u) / jnp.sqrt(s + _LN_EPS)) + b

    x = jnp.transpose(x_lne, (1, 0, 2)).astype(jnp.float32)   # (N, L, E)
    N, L, E = x.shape
    H = n_head
    hd = E // H
    for p in prepared_params:
        h = ln(x, p['ln1_w'], p['ln1_b'])
        qkv = h @ p['w_qkv'].astype(jnp.float32) + p['b_qkv']
        q, k, v = jnp.split(qkv, 3, axis=-1)       # q already carries 1/sqrt(hd)
        q = q.reshape(N, L, H, hd).transpose(0, 2, 1, 3)
        k = k.reshape(N, L, H, hd).transpose(0, 2, 1, 3)
        v = v.reshape(N, L, H, hd).transpose(0, 2, 1, 3)
        sc = jnp.einsum('nhqd,nhkd->nhqk', q, k)
        if attn_mask is not None:
            sc = sc + attn_mask.astype(jnp.float32)
        pw = jax.nn.softmax(sc, axis=-1)
        o = jnp.einsum('nhqk,nhkd->nhqd', pw, v)
        o = o.transpose(0, 2, 1, 3).reshape(N, L, E)
        x = x + o @ p['w_o'].astype(jnp.float32) + p['b_o']
        h2 = ln(x, p['ln2_w'], p['ln2_b'])
        ff = h2 @ p['w_fc'].astype(jnp.float32) + p['b_fc']
        ff = ff * jax.nn.sigmoid(1.702 * ff)
        x = x + ff @ p['w_pj'].astype(jnp.float32) + p['b_pj']
    return jnp.transpose(x, (1, 0, 2))


if __name__ == "__main__":
    # Small config: width=32, layers=2, heads=4, seq=8, batch=2
    width, layers, heads = 32, 2, 4
    L, N = 8, 2

    key = jax.random.PRNGKey(0)
    kx, kp = jax.random.split(key)
    x = jax.random.normal(kx, (L, N, width), jnp.float32)     # (seq, batch, width)

    raw = init_raw_params(kp, width, layers)
    params = [prepare_params(p, heads) for p in raw]

    _use_single_buffer()          # resolve the Buffered(1) probe outside jit

    # 1) default path (attn_mask=None, as used by the FaRL vision tower)
    fwd = jax.jit(lambda inp: transformer_forward(inp, params, heads))
    out = jax.block_until_ready(fwd(x))
    ref = reference_forward(x, params, heads)
    assert out.shape == (L, N, width)
    err = float(jnp.max(jnp.abs(out - ref)))
    assert err < 2e-2, f"no-mask mismatch vs reference (max abs err {err})"

    # 2) additive attention-mask path (CLIP text-tower style causal mask)
    mask = jnp.triu(jnp.full((L, L), -1e9, jnp.float32), k=1)
    fwd_m = jax.jit(
        lambda inp: transformer_forward(inp, params, heads, attn_mask=mask))
    out_m = jax.block_until_ready(fwd_m(x))
    ref_m = reference_forward(x, params, heads, attn_mask=mask)
    err_m = float(jnp.max(jnp.abs(out_m - ref_m)))
    assert err_m < 2e-2, f"masked mismatch vs reference (max abs err {err_m})"

    print("KERNEL_OK")
</pallas_src>

<mosaic_0001>
module attributes {stable_mosaic.version = 11 : i64} {
  func.func @_probe_copy_kernel(%arg0: i32, %arg1: memref<8x128xf32, #tpu.memory_space<vmem>>, %arg2: memref<8x128xf32, #tpu.memory_space<vmem>>) attributes {dimension_semantics = [#tpu.dimension_semantics<arbitrary>], iteration_bounds = array<i64: 1>, scalar_prefetch = 0 : i64, scratch_operands = 0 : i64, tpu.core_type = #tpu.core_type<tc>, window_params = [{pipeline_mode = #tpu.pipeline_mode<synchronous>, transform_indices = @transform_0, window_bounds = array<i64: 8, 128>}, {pipeline_mode = #tpu.pipeline_mode<synchronous>, transform_indices = @transform_1, window_bounds = array<i64: 8, 128>}]} {
    %c0 = arith.constant 0 : index
    %c0_0 = arith.constant 0 : index
    %0 = vector.load %arg1[%c0, %c0_0] : memref<8x128xf32, #tpu.memory_space<vmem>>, vector<8x128xf32>
    %c0_1 = arith.constant 0 : index
    %c0_2 = arith.constant 0 : index
    %1 = vector.load %arg2[%c0_1, %c0_2] : memref<8x128xf32, #tpu.memory_space<vmem>>, vector<8x128xf32>
    tpu.vector_store %arg2[%c0_1, %c0_2], %0 {strides = array<i32>} : memref<8x128xf32, #tpu.memory_space<vmem>>, vector<8x128xf32>,
    return
  }
  func.func @transform_0(%arg0: i32) -> (i32, i32) {
    %c0_i32 = arith.constant 0 : i32
    %c0_i32_0 = arith.constant 0 : i32
    %c0_i32_1 = arith.constant 0 : i32
    return %c0_i32, %c0_i32_0 : i32, i32
  }
  func.func @transform_1(%arg0: i32) -> (i32, i32) {
    %c0_i32 = arith.constant 0 : i32
    %c0_i32_0 = arith.constant 0 : i32
    %c0_i32_1 = arith.constant 0 : i32
    return %c0_i32, %c0_i32_0 : i32, i32
  }
}

module attributes {stable_mosaic.version = 11 : i64} {
  func.func @_ln_qkv_kernel(%arg0: i32, %arg1: memref<16x32xf32, #tpu.memory_space<vmem>>, %arg2: memref<1x32xf32, #tpu.memory_space<vmem>>, %arg3: memref<1x32xf32, #tpu.memory_space<vmem>>, %arg4: memref<32x96xbf16, #tpu.memory_space<vmem>>, %arg5: memref<1x96xf32, #tpu.memory_space<vmem>>, %arg6: memref<16x96xbf16, #tpu.memory_space<vmem>>) attributes {dimension_semantics = [#tpu.dimension_semantics<parallel>], iteration_bounds = array<i64: 1>, scalar_prefetch = 0 : i64, scratch_operands = 0 : i64, tpu.core_type = #tpu.core_type<tc>, window_params = [{transform_indices = @transform_0, window_bounds = array<i64: 16, 32>}, {pipeline_mode = #tpu.pipeline_mode<synchronous>, transform_indices = @transform_1, window_bounds = array<i64: 1, 32>}, {pipeline_mode = #tpu.pipeline_mode<synchronous>, transform_indices = @transform_2, window_bounds = array<i64: 1, 32>}, {pipeline_mode = #tpu.pipeline_mode<synchronous>, transform_indices = @transform_3, window_bounds = array<i64: 32, 96>}, {pipeline_mode = #tpu.pipeline_mode<synchronous>, transform_indices = @transform_4, window_bounds = array<i64: 1, 96>}, {transform_indices = @transform_5, window_bounds = array<i64: 16, 96>}]} {
    %c0 = arith.constant 0 : index
    %c0_0 = arith.constant 0 : index
    %0 = vector.load %arg1[%c0, %c0_0] : memref<16x32xf32, #tpu.memory_space<vmem>>, vector<16x32xf32>
    %cst = arith.constant dense<0.000000e+00> : vector<16xf32>
    %1 = vector.multi_reduction <add>, %0, %cst [1] : vector<16x32xf32> to vector<16xf32>
    %2 = vector.shape_cast %1 : vector<16xf32> to vector<16x1xf32>
    %cst_1 = arith.constant 3.200000e+01 : f32
    %3 = vector.broadcast %cst_1 : f32 to vector<16x1xf32>
    %4 = arith.divf %2, %3 : vector<16x1xf32>
    %5 = vector.broadcast %4 : vector<16x1xf32> to vector<16x32xf32>
    %6 = arith.subf %0, %5 : vector<16x32xf32>
    %7 = arith.mulf %6, %6 : vector<16x32xf32>
    %cst_2 = arith.constant dense<0.000000e+00> : vector<16xf32>
    %8 = vector.multi_reduction <add>, %7, %cst_2 [1] : vector<16x32xf32> to vector<16xf32>
    %9 = vector.shape_cast %8 : vector<16xf32> to vector<16x1xf32>
    %cst_3 = arith.constant 3.200000e+01 : f32
    %10 = vector.broadcast %cst_3 : f32 to vector<16x1xf32>
    %11 = arith.divf %9, %10 : vector<16x1xf32>
    %12 = vector.broadcast %4 : vector<16x1xf32> to vector<16x32xf32>
    %13 = arith.subf %0, %12 : vector<16x32xf32>
    %cst_4 = arith.constant 9.99999974E-6 : f32
    %14 = vector.broadcast %cst_4 : f32 to vector<16x1xf32>
    %15 = arith.addf %11, %14 : vector<16x1xf32>
    %16 = math.rsqrt %15 : vector<16x1xf32>
    %17 = vector.broadcast %16 : vector<16x1xf32> to vector<16x32xf32>
    %18 = arith.mulf %13, %17 : vector<16x32xf32>
    %c0_5 = arith.constant 0 : index
    %c0_6 = arith.constant 0 : index
    %19 = vector.load %arg2[%c0_5, %c0_6] : memref<1x32xf32, #tpu.memory_space<vmem>>, vector<1x32xf32>
    %20 = vector.broadcast %19 : vector<1x32xf32> to vector<16x32xf32>
    %21 = arith.mulf %18, %20 : vector<16x32xf32>
    %c0_7 = arith.constant 0 : index
    %c0_8 = arith.constant 0 : index
    %22 = vector.load %arg3[%c0_7, %c0_8] : memref<1x32xf32, #tpu.memory_space<vmem>>, vector<1x32xf32>
    %23 = vector.broadcast %22 : vector<1x32xf32> to vector<16x32xf32>
    %24 = arith.addf %21, %23 : vector<16x32xf32>
    %25 = arith.truncf %24 : vector<16x32xf32> to vector<16x32xbf16>
    %c0_9 = arith.constant 0 : index
    %c0_10 = arith.constant 0 : index
    %26 = vector.load %arg4[%c0_9, %c0_10] : memref<32x96xbf16, #tpu.memory_space<vmem>>, vector<32x96xbf16>
    %cst_11 = arith.constant dense<0.000000e+00> : vector<16x96xf32>
    %27 = tpu.matmul %25, %26, %cst_11 {dimension_numbers = #tpu.dot_dimension_numbers<[1], [0], [0], [1], [0, 0, 1, 1], [], []>} : vector<16x32xbf16>, vector<32x96xbf16>, vector<16x96xf32> -> vector<16x96xf32>
    %c0_12 = arith.constant 0 : index
    %c0_13 = arith.constant 0 : index
    %28 = vector.load %arg5[%c0_12, %c0_13] : memref<1x96xf32, #tpu.memory_space<vmem>>, vector<1x96xf32>
    %29 = vector.broadcast %28 : vector<1x96xf32> to vector<16x96xf32>
    %30 = arith.addf %27, %29 : vector<16x96xf32>
    %31 = arith.truncf %30 : vector<16x96xf32> to vector<16x96xbf16>
    %c0_14 = arith.constant 0 : index
    %c0_15 = arith.constant 0 : index
    %32 = vector.load %arg6[%c0_14, %c0_15] : memref<16x96xbf16, #tpu.memory_space<vmem>>, vector<16x96xbf16>
    tpu.vector_store %arg6[%c0_14, %c0_15], %31 {strides = array<i32>} : memref<16x96xbf16, #tpu.memory_space<vmem>>, vector<16x96xbf16>,
    return
  }
  func.func @transform_0(%arg0: i32) -> (i32, i32) {
    %c0_i32 = arith.constant 0 : i32
    %c0_i32_0 = arith.constant 0 : i32
    return %arg0, %c0_i32 : i32, i32
  }
  func.func @transform_1(%arg0: i32) -> (i32, i32) {
    %c0_i32 = arith.constant 0 : i32
    %c0_i32_0 = arith.constant 0 : i32
    %c0_i32_1 = arith.constant 0 : i32
    return %c0_i32, %c0_i32_0 : i32, i32
  }
  func.func @transform_2(%arg0: i32) -> (i32, i32) {
    %c0_i32 = arith.constant 0 : i32
    %c0_i32_0 = arith.constant 0 : i32
    %c0_i32_1 = arith.constant 0 : i32
    return %c0_i32, %c0_i32_0 : i32, i32
  }
  func.func @transform_3(%arg0: i32) -> (i32, i32) {
    %c0_i32 = arith.constant 0 : i32
    %c0_i32_0 = arith.constant 0 : i32
    %c0_i32_1 = arith.constant 0 : i32
    return %c0_i32, %c0_i32_0 : i32, i32
  }
  func.func @transform_4(%arg0: i32) -> (i32, i32) {
    %c0_i32 = arith.constant 0 : i32
    %c0_i32_0 = arith.constant 0 : i32
    %c0_i32_1 = arith.constant 0 : i32
    return %c0_i32, %c0_i32_0 : i32, i32
  }
  func.func @transform_5(%arg0: i32) -> (i32, i32) {
    %c0_i32 = arith.constant 0 : i32
    %c0_i32_0 = arith.constant 0 : i32
    return %arg0, %c0_i32 : i32, i32
  }
}

module attributes {stable_mosaic.version = 11 : i64} {
  func.func @mha_kernel(%arg0: i32, %arg1: memref<1x8x96xbf16, #tpu.memory_space<vmem>>, %arg2: memref<1x8x32xbf16, #tpu.memory_space<vmem>>) attributes {dimension_semantics = [#tpu.dimension_semantics<parallel>], iteration_bounds = array<i64: 2>, scalar_prefetch = 0 : i64, scratch_operands = 0 : i64, tpu.core_type = #tpu.core_type<tc>, window_params = [{transform_indices = @transform_0, window_bounds = array<i64: 1, 8, 96>}, {transform_indices = @transform_1, window_bounds = array<i64: 1, 8, 32>}]} {
    %c0 = arith.constant 0 : index
    %c0_0 = arith.constant 0 : index
    %c0_1 = arith.constant 0 : index
    %0 = vector.load %arg1[%c0, %c0_0, %c0_1] : memref<1x8x96xbf16, #tpu.memory_space<vmem>>, vector<1x8x8xbf16>
    %1 = vector.shape_cast %0 : vector<1x8x8xbf16> to vector<8x8xbf16>
    %c0_2 = arith.constant 0 : index
    %c0_3 = arith.constant 0 : index
    %c32 = arith.constant 32 : index
    %2 = vector.load %arg1[%c0_2, %c0_3, %c32] : memref<1x8x96xbf16, #tpu.memory_space<vmem>>, vector<1x8x8xbf16>
    %3 = vector.shape_cast %2 : vector<1x8x8xbf16> to vector<8x8xbf16>
    %c0_4 = arith.constant 0 : index
    %c0_5 = arith.constant 0 : index
    %c64 = arith.constant 64 : index
    %4 = vector.load %arg1[%c0_4, %c0_5, %c64] : memref<1x8x96xbf16, #tpu.memory_space<vmem>>, vector<1x8x8xbf16>
    %5 = vector.shape_cast %4 : vector<1x8x8xbf16> to vector<8x8xbf16>
    %cst = arith.constant dense<0.000000e+00> : vector<8x8xf32>
    %6 = tpu.matmul %1, %3, %cst {dimension_numbers = #tpu.dot_dimension_numbers<[1], [1], [0], [0], [0, 0, 1, 0], [], []>} : vector<8x8xbf16>, vector<8x8xbf16>, vector<8x8xf32> -> vector<8x8xf32>
    %cst_6 = arith.constant dense<0xFF800000> : vector<8xf32>
    %7 = vector.multi_reduction <maximumf>, %6, %cst_6 [1] : vector<8x8xf32> to vector<8xf32>
    %8 = vector.shape_cast %7 : vector<8xf32> to vector<8x1xf32>
    %9 = vector.broadcast %8 : vector<8x1xf32> to vector<8x8xf32>
    %10 = arith.subf %6, %9 : vector<8x8xf32>
    %11 = math.exp %10 : vector<8x8xf32>
    %cst_7 = arith.constant dense<0.000000e+00> : vector<8xf32>
    %12 = vector.multi_reduction <add>, %11, %cst_7 [1] : vector<8x8xf32> to vector<8xf32>
    %13 = vector.shape_cast %12 : vector<8xf32> to vector<8x1xf32>
    %14 = arith.truncf %11 : vector<8x8xf32> to vector<8x8xbf16>
    %cst_8 = arith.constant dense<0.000000e+00> : vector<8x8xf32>
    %15 = tpu.matmul %14, %5, %cst_8 {dimension_numbers = #tpu.dot_dimension_numbers<[1], [0], [0], [1], [0, 0, 1, 1], [], []>} : vector<8x8xbf16>, vector<8x8xbf16>, vector<8x8xf32> -> vector<8x8xf32>
    %16 = tpu.reciprocal %13 {approx = true} : vector<8x1xf32> -> vector<8x1xf32>
    %17 = vector.broadcast %16 : vector<8x1xf32> to vector<8x8xf32>
    %18 = arith.mulf %15, %17 : vector<8x8xf32>
    %19 = arith.truncf %18 : vector<8x8xf32> to vector<8x8xbf16>
    %c0_9 = arith.constant 0 : index
    %c0_10 = arith.constant 0 : index
    %c0_11 = arith.constant 0 : index
    %20 = vector.load %arg2[%c0_9, %c0_10, %c0_11] : memref<1x8x32xbf16, #tpu.memory_space<vmem>>, vector<1x8x8xbf16>
    %21 = vector.shape_cast %20 : vector<1x8x8xbf16> to vector<8x8xbf16>
    %22 = vector.shape_cast %19 : vector<8x8xbf16> to vector<1x8x8xbf16>
    tpu.vector_store %arg2[%c0_9, %c0_10, %c0_11], %22 {strides = array<i32>} : memref<1x8x32xbf16, #tpu.memory_space<vmem>>, vector<1x8x8xbf16>,
    %c0_12 = arith.constant 0 : index
    %c0_13 = arith.constant 0 : index
    %c8 = arith.constant 8 : index
    %23 = vector.load %arg1[%c0_12, %c0_13, %c8] : memref<1x8x96xbf16, #tpu.memory_space<vmem>>, vector<1x8x8xbf16>
    %24 = vector.shape_cast %23 : vector<1x8x8xbf16> to vector<8x8xbf16>
    %c0_14 = arith.constant 0 : index
    %c0_15 = arith.constant 0 : index
    %c40 = arith.constant 40 : index
    %25 = vector.load %arg1[%c0_14, %c0_15, %c40] : memref<1x8x96xbf16, #tpu.memory_space<vmem>>, vector<1x8x8xbf16>
    %26 = vector.shape_cast %25 : vector<1x8x8xbf16> to vector<8x8xbf16>
    %c0_16 = arith.constant 0 : index
    %c0_17 = arith.constant 0 : index
    %c72 = arith.constant 72 : index
    %27 = vector.load %arg1[%c0_16, %c0_17, %c72] : memref<1x8x96xbf16, #tpu.memory_space<vmem>>, vector<1x8x8xbf16>
    %28 = vector.shape_cast %27 : vector<1x8x8xbf16> to vector<8x8xbf16>
    %cst_18 = arith.constant dense<0.000000e+00> : vector<8x8xf32>
    %29 = tpu.matmul %24, %26, %cst_18 {dimension_numbers = #tpu.dot_dimension_numbers<[1], [1], [0], [0], [0, 0, 1, 0], [], []>} : vector<8x8xbf16>, vector<8x8xbf16>, vector<8x8xf32> -> vector<8x8xf32>
    %cst_19 = arith.constant dense<0xFF800000> : vector<8xf32>
    %30 = vector.multi_reduction <maximumf>, %29, %cst_19 [1] : vector<8x8xf32> to vector<8xf32>
    %31 = vector.shape_cast %30 : vector<8xf32> to vector<8x1xf32>
    %32 = vector.broadcast %31 : vector<8x1xf32> to vector<8x8xf32>
    %33 = arith.subf %29, %32 : vector<8x8xf32>
    %34 = math.exp %33 : vector<8x8xf32>
    %cst_20 = arith.constant dense<0.000000e+00> : vector<8xf32>
    %35 = vector.multi_reduction <add>, %34, %cst_20 [1] : vector<8x8xf32> to vector<8xf32>
    %36 = vector.shape_cast %35 : vector<8xf32> to vector<8x1xf32>
    %37 = arith.truncf %34 : vector<8x8xf32> to vector<8x8xbf16>
    %cst_21 = arith.constant dense<0.000000e+00> : vector<8x8xf32>
    %38 = tpu.matmul %37, %28, %cst_21 {dimension_numbers = #tpu.dot_dimension_numbers<[1], [0], [0], [1], [0, 0, 1, 1], [], []>} : vector<8x8xbf16>, vector<8x8xbf16>, vector<8x8xf32> -> vector<8x8xf32>
    %39 = tpu.reciprocal %36 {approx = true} : vector<8x1xf32> -> vector<8x1xf32>
    %40 = vector.broadcast %39 : vector<8x1xf32> to vector<8x8xf32>
    %41 = arith.mulf %38, %40 : vector<8x8xf32>
    %42 = arith.truncf %41 : vector<8x8xf32> to vector<8x8xbf16>
    %c0_22 = arith.constant 0 : index
    %c0_23 = arith.constant 0 : index
    %c8_24 = arith.constant 8 : index
    %43 = vector.load %arg2[%c0_22, %c0_23, %c8_24] : memref<1x8x32xbf16, #tpu.memory_space<vmem>>, vector<1x8x8xbf16>
    %44 = vector.shape_cast %43 : vector<1x8x8xbf16> to vector<8x8xbf16>
    %45 = vector.shape_cast %42 : vector<8x8xbf16> to vector<1x8x8xbf16>
    tpu.vector_store %arg2[%c0_22, %c0_23, %c8_24], %45 {strides = array<i32>} : memref<1x8x32xbf16, #tpu.memory_space<vmem>>, vector<1x8x8xbf16>,
    %c0_25 = arith.constant 0 : index
    %c0_26 = arith.constant 0 : index
    %c16 = arith.constant 16 : index
    %46 = vector.load %arg1[%c0_25, %c0_26, %c16] : memref<1x8x96xbf16, #tpu.memory_space<vmem>>, vector<1x8x8xbf16>
    %47 = vector.shape_cast %46 : vector<1x8x8xbf16> to vector<8x8xbf16>
    %c0_27 = arith.constant 0 : index
    %c0_28 = arith.constant 0 : index
    %c48 = arith.constant 48 : index
    %48 = vector.load %arg1[%c0_27, %c0_28, %c48] : memref<1x8x96xbf16, #tpu.memory_space<vmem>>, vector<1x8x8xbf16>
    %49 = vector.shape_cast %48 : vector<1x8x8xbf16> to vector<8x8xbf16>
    %c0_29 = arith.constant 0 : index
    %c0_30 = arith.constant 0 : index
    %c80 = arith.constant 80 : index
    %50 = vector.load %arg1[%c0_29, %c0_30, %c80] : memref<1x8x96xbf16, #tpu.memory_space<vmem>>, vector<1x8x8xbf16>
    %51 = vector.shape_cast %50 : vector<1x8x8xbf16> to vector<8x8xbf16>
    %cst_31 = arith.constant dense<0.000000e+00> : vector<8x8xf32>
    %52 = tpu.matmul %47, %49, %cst_31 {dimension_numbers = #tpu.dot_dimension_numbers<[1], [1], [0], [0], [0, 0, 1, 0], [], []>} : vector<8x8xbf16>, vector<8x8xbf16>, vector<8x8xf32> -> vector<8x8xf32>
    %cst_32 = arith.constant dense<0xFF800000> : vector<8xf32>
    %53 = vector.multi_reduction <maximumf>, %52, %cst_32 [1] : vector<8x8xf32> to vector<8xf32>
    %54 = vector.shape_cast %53 : vector<8xf32> to vector<8x1xf32>
    %55 = vector.broadcast %54 : vector<8x1xf32> to vector<8x8xf32>
    %56 = arith.subf %52, %55 : vector<8x8xf32>
    %57 = math.exp %56 : vector<8x8xf32>
    %cst_33 = arith.constant dense<0.000000e+00> : vector<8xf32>
    %58 = vector.multi_reduction <add>, %57, %cst_33 [1] : vector<8x8xf32> to vector<8xf32>
    %59 = vector.shape_cast %58 : vector<8xf32> to vector<8x1xf32>
    %60 = arith.truncf %57 : vector<8x8xf32> to vector<8x8xbf16>
    %cst_34 = arith.constant dense<0.000000e+00> : vector<8x8xf32>
    %61 = tpu.matmul %60, %51, %cst_34 {dimension_numbers = #tpu.dot_dimension_numbers<[1], [0], [0], [1], [0, 0, 1, 1], [], []>} : vector<8x8xbf16>, vector<8x8xbf16>, vector<8x8xf32> -> vector<8x8xf32>
    %62 = tpu.reciprocal %59 {approx = true} : vector<8x1xf32> -> vector<8x1xf32>
    %63 = vector.broadcast %62 : vector<8x1xf32> to vector<8x8xf32>
    %64 = arith.mulf %61, %63 : vector<8x8xf32>
    %65 = arith.truncf %64 : vector<8x8xf32> to vector<8x8xbf16>
    %c0_35 = arith.constant 0 : index
    %c0_36 = arith.constant 0 : index
    %c16_37 = arith.constant 16 : index
    %66 = vector.load %arg2[%c0_35, %c0_36, %c16_37] : memref<1x8x32xbf16, #tpu.memory_space<vmem>>, vector<1x8x8xbf16>
    %67 = vector.shape_cast %66 : vector<1x8x8xbf16> to vector<8x8xbf16>
    %68 = vector.shape_cast %65 : vector<8x8xbf16> to vector<1x8x8xbf16>
    tpu.vector_store %arg2[%c0_35, %c0_36, %c16_37], %68 {strides = array<i32>} : memref<1x8x32xbf16, #tpu.memory_space<vmem>>, vector<1x8x8xbf16>,
    %c0_38 = arith.constant 0 : index
    %c0_39 = arith.constant 0 : index
    %c24 = arith.constant 24 : index
    %69 = vector.load %arg1[%c0_38, %c0_39, %c24] : memref<1x8x96xbf16, #tpu.memory_space<vmem>>, vector<1x8x8xbf16>
    %70 = vector.shape_cast %69 : vector<1x8x8xbf16> to vector<8x8xbf16>
    %c0_40 = arith.constant 0 : index
    %c0_41 = arith.constant 0 : index
    %c56 = arith.constant 56 : index
    %71 = vector.load %arg1[%c0_40, %c0_41, %c56] : memref<1x8x96xbf16, #tpu.memory_space<vmem>>, vector<1x8x8xbf16>
    %72 = vector.shape_cast %71 : vector<1x8x8xbf16> to vector<8x8xbf16>
    %c0_42 = arith.constant 0 : index
    %c0_43 = arith.constant 0 : index
    %c88 = arith.constant 88 : index
    %73 = vector.load %arg1[%c0_42, %c0_43, %c88] : memref<1x8x96xbf16, #tpu.memory_space<vmem>>, vector<1x8x8xbf16>
    %74 = vector.shape_cast %73 : vector<1x8x8xbf16> to vector<8x8xbf16>
    %cst_44 = arith.constant dense<0.000000e+00> : vector<8x8xf32>
    %75 = tpu.matmul %70, %72, %cst_44 {dimension_numbers = #tpu.dot_dimension_numbers<[1], [1], [0], [0], [0, 0, 1, 0], [], []>} : vector<8x8xbf16>, vector<8x8xbf16>, vector<8x8xf32> -> vector<8x8xf32>
    %cst_45 = arith.constant dense<0xFF800000> : vector<8xf32>
    %76 = vector.multi_reduction <maximumf>, %75, %cst_45 [1] : vector<8x8xf32> to vector<8xf32>
    %77 = vector.shape_cast %76 : vector<8xf32> to vector<8x1xf32>
    %78 = vector.broadcast %77 : vector<8x1xf32> to vector<8x8xf32>
    %79 = arith.subf %75, %78 : vector<8x8xf32>
    %80 = math.exp %79 : vector<8x8xf32>
    %cst_46 = arith.constant dense<0.000000e+00> : vector<8xf32>
    %81 = vector.multi_reduction <add>, %80, %cst_46 [1] : vector<8x8xf32> to vector<8xf32>
    %82 = vector.shape_cast %81 : vector<8xf32> to vector<8x1xf32>
    %83 = arith.truncf %80 : vector<8x8xf32> to vector<8x8xbf16>
    %cst_47 = arith.constant dense<0.000000e+00> : vector<8x8xf32>
    %84 = tpu.matmul %83, %74, %cst_47 {dimension_numbers = #tpu.dot_dimension_numbers<[1], [0], [0], [1], [0, 0, 1, 1], [], []>} : vector<8x8xbf16>, vector<8x8xbf16>, vector<8x8xf32> -> vector<8x8xf32>
    %85 = tpu.reciprocal %82 {approx = true} : vector<8x1xf32> -> vector<8x1xf32>
    %86 = vector.broadcast %85 : vector<8x1xf32> to vector<8x8xf32>
    %87 = arith.mulf %84, %86 : vector<8x8xf32>
    %88 = arith.truncf %87 : vector<8x8xf32> to vector<8x8xbf16>
    %c0_48 = arith.constant 0 : index
    %c0_49 = arith.constant 0 : index
    %c24_50 = arith.constant 24 : index
    %89 = vector.load %arg2[%c0_48, %c0_49, %c24_50] : memref<1x8x32xbf16, #tpu.memory_space<vmem>>, vector<1x8x8xbf16>
    %90 = vector.shape_cast %89 : vector<1x8x8xbf16> to vector<8x8xbf16>
    %91 = vector.shape_cast %88 : vector<8x8xbf16> to vector<1x8x8xbf16>
    tpu.vector_store %arg2[%c0_48, %c0_49, %c24_50], %91 {strides = array<i32>} : memref<1x8x32xbf16, #tpu.memory_space<vmem>>, vector<1x8x8xbf16>,
    return
  }
  func.func @transform_0(%arg0: i32) -> (i32, i32, i32) {
    %c0_i32 = arith.constant 0 : i32
    %c0_i32_0 = arith.constant 0 : i32
    %c0_i32_1 = arith.constant 0 : i32
    return %arg0, %c0_i32, %c0_i32_0 : i32, i32, i32
  }
  func.func @transform_1(%arg0: i32) -> (i32, i32, i32) {
    %c0_i32 = arith.constant 0 : i32
    %c0_i32_0 = arith.constant 0 : i32
    %c0_i32_1 = arith.constant 0 : i32
    return %arg0, %c0_i32, %c0_i32_0 : i32, i32, i32
  }
}

module attributes {stable_mosaic.version = 11 : i64} {
  func.func @_proj_mlp_kernel(%arg0: i32, %arg1: memref<16x32xf32, #tpu.memory_space<vmem>>, %arg2: memref<16x32xbf16, #tpu.memory_space<vmem>>, %arg3: memref<32x32xbf16, #tpu.memory_space<vmem>>, %arg4: memref<1x32xf32, #tpu.memory_space<vmem>>, %arg5: memref<1x32xf32, #tpu.memory_space<vmem>>, %arg6: memref<1x32xf32, #tpu.memory_space<vmem>>, %arg7: memref<32x128xbf16, #tpu.memory_space<vmem>>, %arg8: memref<1x128xf32, #tpu.memory_space<vmem>>, %arg9: memref<128x32xbf16, #tpu.memory_space<vmem>>, %arg10: memref<1x32xf32, #tpu.memory_space<vmem>>, %arg11: memref<16x32xf32, #tpu.memory_space<vmem>>) attributes {dimension_semantics = [#tpu.dimension_semantics<parallel>], iteration_bounds = array<i64: 1>, scalar_prefetch = 0 : i64, scratch_operands = 0 : i64, tpu.core_type = #tpu.core_type<tc>, window_params = [{transform_indices = @transform_0, window_bounds = array<i64: 16, 32>}, {transform_indices = @transform_1, window_bounds = array<i64: 16, 32>}, {pipeline_mode = #tpu.pipeline_mode<synchronous>, transform_indices = @transform_2, window_bounds = array<i64: 32, 32>}, {pipeline_mode = #tpu.pipeline_mode<synchronous>, transform_indices = @transform_3, window_bounds = array<i64: 1, 32>}, {pipeline_mode = #tpu.pipeline_mode<synchronous>, transform_indices = @transform_4, window_bounds = array<i64: 1, 32>}, {pipeline_mode = #tpu.pipeline_mode<synchronous>, transform_indices = @transform_5, window_bounds = array<i64: 1, 32>}, {pipeline_mode = #tpu.pipeline_mode<synchronous>, transform_indices = @transform_6, window_bounds = array<i64: 32, 128>}, {pipeline_mode = #tpu.pipeline_mode<synchronous>, transform_indices = @transform_7, window_bounds = array<i64: 1, 128>}, {pipeline_mode = #tpu.pipeline_mode<synchronous>, transform_indices = @transform_8, window_bounds = array<i64: 128, 32>}, {pipeline_mode = #tpu.pipeline_mode<synchronous>, transform_indices = @transform_9, window_bounds = array<i64: 1, 32>}, {transform_indices = @transform_10, window_bounds = array<i64: 16, 32>}]} {
    %c0 = arith.constant 0 : index
    %c0_0 = arith.constant 0 : index
    %0 = vector.load %arg1[%c0, %c0_0] : memref<16x32xf32, #tpu.memory_space<vmem>>, vector<16x32xf32>
    %c0_1 = arith.constant 0 : index
    %c0_2 = arith.constant 0 : index
    %1 = vector.load %arg2[%c0_1, %c0_2] : memref<16x32xbf16, #tpu.memory_space<vmem>>, vector<16x32xbf16>
    %c0_3 = arith.constant 0 : index
    %c0_4 = arith.constant 0 : index
    %2 = vector.load %arg3[%c0_3, %c0_4] : memref<32x32xbf16, #tpu.memory_space<vmem>>, vector<32x32xbf16>
    %cst = arith.constant dense<0.000000e+00> : vector<16x32xf32>
    %3 = tpu.matmul %1, %2, %cst {dimension_numbers = #tpu.dot_dimension_numbers<[1], [0], [0], [1], [0, 0, 1, 1], [], []>} : vector<16x32xbf16>, vector<32x32xbf16>, vector<16x32xf32> -> vector<16x32xf32>
    %4 = arith.addf %0, %3 : vector<16x32xf32>
    %c0_5 = arith.constant 0 : index
    %c0_6 = arith.constant 0 : index
    %5 = vector.load %arg4[%c0_5, %c0_6] : memref<1x32xf32, #tpu.memory_space<vmem>>, vector<1x32xf32>
    %6 = vector.broadcast %5 : vector<1x32xf32> to vector<16x32xf32>
    %7 = arith.addf %4, %6 : vector<16x32xf32>
    %cst_7 = arith.constant dense<0.000000e+00> : vector<16xf32>
    %8 = vector.multi_reduction <add>, %7, %cst_7 [1] : vector<16x32xf32> to vector<16xf32>
    %9 = vector.shape_cast %8 : vector<16xf32> to vector<16x1xf32>
    %cst_8 = arith.constant 3.200000e+01 : f32
    %10 = vector.broadcast %cst_8 : f32 to vector<16x1xf32>
    %11 = arith.divf %9, %10 : vector<16x1xf32>
    %12 = vector.broadcast %11 : vector<16x1xf32> to vector<16x32xf32>
    %13 = arith.subf %7, %12 : vector<16x32xf32>
    %14 = arith.mulf %13, %13 : vector<16x32xf32>
    %cst_9 = arith.constant dense<0.000000e+00> : vector<16xf32>
    %15 = vector.multi_reduction <add>, %14, %cst_9 [1] : vector<16x32xf32> to vector<16xf32>
    %16 = vector.shape_cast %15 : vector<16xf32> to vector<16x1xf32>
    %cst_10 = arith.constant 3.200000e+01 : f32
    %17 = vector.broadcast %cst_10 : f32 to vector<16x1xf32>
    %18 = arith.divf %16, %17 : vector<16x1xf32>
    %19 = vector.broadcast %11 : vector<16x1xf32> to vector<16x32xf32>
    %20 = arith.subf %7, %19 : vector<16x32xf32>
    %cst_11 = arith.constant 9.99999974E-6 : f32
    %21 = vector.broadcast %cst_11 : f32 to vector<16x1xf32>
    %22 = arith.addf %18, %21 : vector<16x1xf32>
    %23 = math.rsqrt %22 : vector<16x1xf32>
    %24 = vector.broadcast %23 : vector<16x1xf32> to vector<16x32xf32>
    %25 = arith.mulf %20, %24 : vector<16x32xf32>
    %c0_12 = arith.constant 0 : index
    %c0_13 = arith.constant 0 : index
    %26 = vector.load %arg5[%c0_12, %c0_13] : memref<1x32xf32, #tpu.memory_space<vmem>>, vector<1x32xf32>
    %27 = vector.broadcast %26 : vector<1x32xf32> to vector<16x32xf32>
    %28 = arith.mulf %25, %27 : vector<16x32xf32>
    %c0_14 = arith.constant 0 : index
    %c0_15 = arith.constant 0 : index
    %29 = vector.load %arg6[%c0_14, %c0_15] : memref<1x32xf32, #tpu.memory_space<vmem>>, vector<1x32xf32>
    %30 = vector.broadcast %29 : vector<1x32xf32> to vector<16x32xf32>
    %31 = arith.addf %28, %30 : vector<16x32xf32>
    %32 = arith.truncf %31 : vector<16x32xf32> to vector<16x32xbf16>
    %c0_16 = arith.constant 0 : index
    %c0_17 = arith.constant 0 : index
    %33 = vector.load %arg7[%c0_16, %c0_17] : memref<32x128xbf16, #tpu.memory_space<vmem>>, vector<32x128xbf16>
    %cst_18 = arith.constant dense<0.000000e+00> : vector<16x128xf32>
    %34 = tpu.matmul %32, %33, %cst_18 {dimension_numbers = #tpu.dot_dimension_numbers<[1], [0], [0], [1], [0, 0, 1, 1], [], []>} : vector<16x32xbf16>, vector<32x128xbf16>, vector<16x128xf32> -> vector<16x128xf32>
    %c0_19 = arith.constant 0 : index
    %c0_20 = arith.constant 0 : index
    %35 = vector.load %arg8[%c0_19, %c0_20] : memref<1x128xf32, #tpu.memory_space<vmem>>, vector<1x128xf32>
    %36 = vector.broadcast %35 : vector<1x128xf32> to vector<16x128xf32>
    %37 = arith.addf %34, %36 : vector<16x128xf32>
    %cst_21 = arith.constant 1.702000e+00 : f32
    %38 = vector.broadcast %cst_21 : f32 to vector<16x128xf32>
    %39 = arith.mulf %38, %37 : vector<16x128xf32>
    %40 = arith.negf %39 : vector<16x128xf32>
    %41 = math.exp %40 : vector<16x128xf32>
    %cst_22 = arith.constant 1.000000e+00 : f32
    %42 = vector.broadcast %cst_22 : f32 to vector<16x128xf32>
    %43 = arith.addf %42, %41 : vector<16x128xf32>
    %44 = arith.divf %42, %43 : vector<16x128xf32>
    %45 = arith.mulf %37, %44 : vector<16x128xf32>
    %46 = arith.truncf %45 : vector<16x128xf32> to vector<16x128xbf16>
    %c0_23 = arith.constant 0 : index
    %c0_24 = arith.constant 0 : index
    %47 = vector.load %arg9[%c0_23, %c0_24] : memref<128x32xbf16, #tpu.memory_space<vmem>>, vector<128x32xbf16>
    %cst_25 = arith.constant dense<0.000000e+00> : vector<16x32xf32>
    %48 = tpu.matmul %46, %47, %cst_25 {dimension_numbers = #tpu.dot_dimension_numbers<[1], [0], [0], [1], [0, 0, 1, 1], [], []>} : vector<16x128xbf16>, vector<128x32xbf16>, vector<16x32xf32> -> vector<16x32xf32>
    %49 = arith.addf %7, %48 : vector<16x32xf32>
    %c0_26 = arith.constant 0 : index
    %c0_27 = arith.constant 0 : index
    %50 = vector.load %arg10[%c0_26, %c0_27] : memref<1x32xf32, #tpu.memory_space<vmem>>, vector<1x32xf32>
    %51 = vector.broadcast %50 : vector<1x32xf32> to vector<16x32xf32>
    %52 = arith.addf %49, %51 : vector<16x32xf32>
    %c0_28 = arith.constant 0 : index
    %c0_29 = arith.constant 0 : index
    %53 = vector.load %arg11[%c0_28, %c0_29] : memref<16x32xf32, #tpu.memory_space<vmem>>, vector<16x32xf32>
    tpu.vector_store %arg11[%c0_28, %c0_29], %52 {strides = array<i32>} : memref<16x32xf32, #tpu.memory_space<vmem>>, vector<16x32xf32>,
    return
  }
  func.func @transform_0(%arg0: i32) -> (i32, i32) {
    %c0_i32 = arith.constant 0 : i32
    %c0_i32_0 = arith.constant 0 : i32
    return %arg0, %c0_i32 : i32, i32
  }
  func.func @transform_1(%arg0: i32) -> (i32, i32) {
    %c0_i32 = arith.constant 0 : i32
    %c0_i32_0 = arith.constant 0 : i32
    return %arg0, %c0_i32 : i32, i32
  }
  func.func @transform_2(%arg0: i32) -> (i32, i32) {
    %c0_i32 = arith.constant 0 : i32
    %c0_i32_0 = arith.constant 0 : i32
    %c0_i32_1 = arith.constant 0 : i32
    return %c0_i32, %c0_i32_0 : i32, i32
  }
  func.func @transform_3(%arg0: i32) -> (i32, i32) {
    %c0_i32 = arith.constant 0 : i32
    %c0_i32_0 = arith.constant 0 : i32
    %c0_i32_1 = arith.constant 0 : i32
    return %c0_i32, %c0_i32_0 : i32, i32
  }
  func.func @transform_4(%arg0: i32) -> (i32, i32) {
    %c0_i32 = arith.constant 0 : i32
    %c0_i32_0 = arith.constant 0 : i32
    %c0_i32_1 = arith.constant 0 : i32
    return %c0_i32, %c0_i32_0 : i32, i32
  }
  func.func @transform_5(%arg0: i32) -> (i32, i32) {
    %c0_i32 = arith.constant 0 : i32
    %c0_i32_0 = arith.constant 0 : i32
    %c0_i32_1 = arith.constant 0 : i32
    return %c0_i32, %c0_i32_0 : i32, i32
  }
  func.func @transform_6(%arg0: i32) -> (i32, i32) {
    %c0_i32 = arith.constant 0 : i32
    %c0_i32_0 = arith.constant 0 : i32
    %c0_i32_1 = arith.constant 0 : i32
    return %c0_i32, %c0_i32_0 : i32, i32
  }
  func.func @transform_7(%arg0: i32) -> (i32, i32) {
    %c0_i32 = arith.constant 0 : i32
    %c0_i32_0 = arith.constant 0 : i32
    %c0_i32_1 = arith.constant 0 : i32
    return %c0_i32, %c0_i32_0 : i32, i32
  }
  func.func @transform_8(%arg0: i32) -> (i32, i32) {
    %c0_i32 = arith.constant 0 : i32
    %c0_i32_0 = arith.constant 0 : i32
    %c0_i32_1 = arith.constant 0 : i32
    return %c0_i32, %c0_i32_0 : i32, i32
  }
  func.func @transform_9(%arg0: i32) -> (i32, i32) {
    %c0_i32 = arith.constant 0 : i32
    %c0_i32_0 = arith.constant 0 : i32
    %c0_i32_1 = arith.constant 0 : i32
    return %c0_i32, %c0_i32_0 : i32, i32
  }
  func.func @transform_10(%arg0: i32) -> (i32, i32) {
    %c0_i32 = arith.constant 0 : i32
    %c0_i32_0 = arith.constant 0 : i32
    return %arg0, %c0_i32 : i32, i32
  }
}

</mosaic_0001>

<llo_original>
// kernel: tpu_custom_call.1
$region0: #{tpu_custom_call.1}
  #allocation0 [shape = 'u32[]', space=smem, size = 0x4, offset = 0x4, fixed_abs, tag = 'smem constant byte address 0x4 - core index']
  #allocation1 [shape = 'u32[144,128]{1,0:T(1,128)}', space=vmem, size = 0x12000, scoped, tag = 'internal scratch']
  %s0 = inlined_call_operand.hbm [shape: f32[8,128], index: 0, kind: input, shape index: {}]
  %s1 = inlined_call_operand.hbm [shape: f32[8,128], index: 1, kind: output, shape index: {}]
  %s2 = sld [smem:[#allocation0]]
  $region18: #{tpu_custom_call.1} parent=0
    _
  %s4 = ssub.s32 1, %s2
  %s5 = scalar_select 0, %s4, %s2
  $region1: #{tpu_custom_call.1} parent=0
    #allocation2 [shape = 'u8[4096]{0}', space=vmem, size = 0x1000, scoped, tag = 'input window, operand 0, single buffered']
    #allocation3 [shape = 's32[1]{0}', space=sflag, size = 0x4, scoped, tag = 'scoped memory for tpu_custom_call.1']
    #allocation4 [shape = 's32[1]{0}', space=sflag, size = 0x4, scoped, tag = 'scoped memory for tpu_custom_call.1']
    #allocation5 [shape = 'u8[4096]{0}', space=vmem, size = 0x1000, scoped, tag = 'output window, operand 0, single buffered']
    %6 = vsyncpa [#allocation3], 0
    %7 = vsyncpa [#allocation4], 0
    // Predicated region
    $region2: #{tpu_custom_call.1} parent=1 // pred_check
      _
    $region3: #{tpu_custom_call.1} parent=1 // pred_check_branch
      %9 = sbr.rel (0) target = $region5
    $region4: #{tpu_custom_call.1} parent=1 // pred_region
      %s11 = ssub.s32 128, 128
      %12 = vsyncadd [#allocation3], %s11
      %s14 = sshll.u32 [#allocation2], 4
      %s15 = int_to_ptr.vmem [resolvable:$true] %s14
      %17 = dma.hbm_to_vmem [thread:$0]  %s0, 128, %s15, [#allocation3]
    $region5: #{tpu_custom_call.1} parent=1 // pred_fallthru
      _
    // Predicated region
    $region6: #{tpu_custom_call.1} parent=1 // pred_check
      _
    $region7: #{tpu_custom_call.1} parent=1 // pred_check_branch
      %19 = sbr.rel (0) target = $region9
    $region8: #{tpu_custom_call.1} parent=1 // pred_region
      %20 = dma.done [#allocation3], 128
    $region9: #{tpu_custom_call.1} parent=1 // pred_fallthru
      _
    %v21 = vld [vmem:[#allocation2] sm:$0xff]
    %22 = vst [vmem:[#allocation5] sm:$0xff] %v21
    // Predicated region
    $region10: #{tpu_custom_call.1} parent=1 // pred_check
      _
    $region11: #{tpu_custom_call.1} parent=1 // pred_check_branch
      %24 = sbr.rel (0) target = $region13
    $region12: #{tpu_custom_call.1} parent=1 // pred_region
      %s26 = ssub.s32 128, 128
      %27 = vsyncadd [#allocation4], %s26
      %s29 = sshll.u32 [#allocation5], 4
      %s30 = int_to_ptr.vmem [resolvable:$true] %s29
      %32 = dma.vmem_to_hbm [thread:$0]  %s30, 128, %s1, [#allocation4]
    $region13: #{tpu_custom_call.1} parent=1 // pred_fallthru
      _
    // Predicated region
    $region14: #{tpu_custom_call.1} parent=1 // pred_check
      _
    $region15: #{tpu_custom_call.1} parent=1 // pred_check_branch
      %34 = sbr.rel (0) target = $region17
    $region16: #{tpu_custom_call.1} parent=1 // pred_region
      %35 = dma.done [#allocation4], 128
    $region17: #{tpu_custom_call.1} parent=1 // pred_fallthru
      _
    %36 = vsyncpa [#allocation3], 1
    %37 = vsyncpa [#allocation4], 1

// kernel: _lambda_.6
$region0: #{_lambda_.6}
  #allocation0 [shape = 'u32[]', space=smem, size = 0x4, offset = 0x4, fixed_abs, tag = 'smem constant byte address 0x4 - core index']
  #allocation1 [shape = 'u32[144,128]{1,0:T(1,128)}', space=vmem, size = 0x12000, scoped, tag = 'internal scratch']
  %s0 = inlined_call_operand.vmem [shape: f32[16,32], index: 0, kind: input, shape index: {}]
  %s1 = inlined_call_operand.vmem [shape: f32[1,32], index: 1, kind: input, shape index: {}]
  %s2 = inlined_call_operand.vmem [shape: f32[1,32], index: 2, kind: input, shape index: {}]
  %s3 = inlined_call_operand.vmem [shape: bf16[32,96], index: 3, kind: input, shape index: {}]
  %s4 = inlined_call_operand.vmem [shape: f32[1,96], index: 4, kind: input, shape index: {}]
  %s5 = inlined_call_operand.vmem [shape: bf16[16,96], index: 5, kind: output, shape index: {}]
  %s6 = sld [smem:[#allocation0]]
  $region30: #{_lambda_.6} parent=0
    _
  %s8 = ssub.s32 1, %s6
  %s9 = scalar_select 0, %s8, %s6
  // Predicated region
  $region2: #{_lambda_.6} parent=0 // pred_check
    _
  $region3: #{_lambda_.6} parent=0 // pred_check_branch
    %11 = sbr.rel (0) target = $region5
  $region4: #{_lambda_.6} parent=0 // pred_region
    _
  $region5: #{_lambda_.6} parent=0 // pred_fallthru
    _
  // Predicated region
  $region6: #{_lambda_.6} parent=0 // pred_check
    _
  $region7: #{_lambda_.6} parent=0 // pred_check_branch
    %13 = sbr.rel (0) target = $region9
  $region8: #{_lambda_.6} parent=0 // pred_region
    _
  $region9: #{_lambda_.6} parent=0 // pred_fallthru
    _
  // Predicated region
  $region10: #{_lambda_.6} parent=0 // pred_check
    _
  $region11: #{_lambda_.6} parent=0 // pred_check_branch
    %15 = sbr.rel (0) target = $region13
  $region12: #{_lambda_.6} parent=0 // pred_region
    _
  $region13: #{_lambda_.6} parent=0 // pred_fallthru
    _
  // Predicated region
  $region14: #{_lambda_.6} parent=0 // pred_check
    _
  $region15: #{_lambda_.6} parent=0 // pred_check_branch
    %17 = sbr.rel (0) target = $region17
  $region16: #{_lambda_.6} parent=0 // pred_region
    _
  $region17: #{_lambda_.6} parent=0 // pred_fallthru
    _
  // Predicated region
  $region18: #{_lambda_.6} parent=0 // pred_check
    _
  $region19: #{_lambda_.6} parent=0 // pred_check_branch
    %19 = sbr.rel (0) target = $region21
  $region20: #{_lambda_.6} parent=0 // pred_region
    _
  $region21: #{_lambda_.6} parent=0 // pred_fallthru
    _
  %v21 = vld [vmem:[%s0] sm:$0xff]
  %v22 = vld [vmem:[%s0 + $0x8] sm:$0xff]
  %vm23 = vcmask 261120
  %v24 = vsel %vm23, %v21, 0.0
  %25 = vadd.xlane.f32.xlu0 %v24
  %v26 = vpop.xlane.xlu0 %25
  %v27 = vsel %vm23, %v22, 0.0
  %28 = vadd.xlane.f32.xlu0 %v27
  %v29 = vpop.xlane.xlu0 %28
  %v30 = vrcp.pop 32.0
  %v31 = vmul.f32 %v26, %v30
  %v32 = vmul.f32 %v29, %v30
  %v33 = vsub.f32 %v21, %v31
  %v34 = vsub.f32 %v22, %v32
  %v35 = vmul.f32 %v33, %v33
  %v36 = vmul.f32 %v34, %v34
  %v37 = vsel %vm23, %v35, 0.0
  %38 = vadd.xlane.f32.xlu0 %v37
  %v39 = vpop.xlane.xlu0 %38
  %v40 = vsel %vm23, %v36, 0.0
  %41 = vadd.xlane.f32.xlu0 %v40
  %v42 = vpop.xlane.xlu0 %41
  %v43 = vmul.f32 %v39, %v30
  %v44 = vmul.f32 %v42, %v30
  %v45 = vadd.f32 %v43, 1e-05
  %v46 = vadd.f32 %v44, 1e-05
  %v47 = vrsqrt.pop %v45
  %v48 = vrsqrt.pop %v46
  %v49 = vmul.f32 %v33, %v47
  %v50 = vmul.f32 %v34, %v48
  %v51 = vld [vmem:[%s1] sm:$0x1]
  %v53 = vlaneseq
  %v54 = vshrl.u32 %v53, 7
  %v55 = vsub.s32 0, %v54
  %v56 = vrot.slane %v51, %v55
  %v58 = vmul.f32 %v49, %v56
  %v59 = vmul.f32 %v50, %v56
  %v60 = vld [vmem:[%s2] sm:$0x1]
  %v62 = vlaneseq
  %v63 = vshrl.u32 %v62, 7
  %v64 = vsub.s32 0, %v63
  %v65 = vrot.slane %v60, %v64
  %v67 = vadd.f32 %v58, %v65
  %v68 = vadd.f32 %v59, %v65
  %v69 = vpack.c.bf16 %v68, %v67
  %v70 = vld [vmem:[%s3] sm:$0xf]
  %v71 = vld [vmem:[%s3 + $0x4] sm:$0xf]
  %v72 = vld [vmem:[%s3 + $0x8] sm:$0xf]
  %v73 = vld [vmem:[%s3 + $0xc] sm:$0xf]
  %v74 = vld [vmem:[%s4] sm:$0x1]
  %v76 = vlaneseq
  %v77 = vshrl.u32 %v76, 7
  %v78 = vsub.s32 0, %v77
  %v79 = vrot.slane %v74, %v78
  %v85 = vunpack.c.l.b16 %v70
  %v86 = vunpack.c.l.b16 %v71
  %v87 = vunpack.c.l.b16 %v72
  %v88 = vunpack.c.l.b16 %v73
  %v89 = vpack.c.b16 %v86, %v85
  %v90 = vpack.c.b16 %v88, %v87
  %v94 = vsel %vm23, %v69, 0
  %96 = vmatprep.subr.bf16.mxu0 0
  %97 = vmatpush1.bf16.msra.mxu0 %v89
  %98 = vmatprep.subr.bf16.mxu0 0
  %99 = vmatpush1.bf16.msra.mxu0 %v90
  %100 = vmatprep.subr.bf16.mxu0 0
  %101 = vmatpush1.bf16.msra.mxu0 0
  %102 = vmatprep.subr.bf16.mxu0 0
  %103 = vmatpush1.bf16.msra.mxu0 0
  %104 = vmatprep.subr.bf16.mxu0 0
  %105 = vmatpush1.bf16.msra.mxu0 0
  %106 = vmatprep.subr.bf16.mxu0 0
  %107 = vmatpush1.bf16.msra.mxu0 0
  %108 = vmatprep.subr.bf16.mxu0 0
  %109 = vmatpush1.bf16.msra.mxu0 0
  %110 = vmatprep.subr.bf16.mxu0 0
  %111 = vmatpush1.bf16.msra.mxu0 0
  %112 = vmatprep.subr.bf16.mxu0 0
  %113 = vmatpush1.bf16.msra.mxu0 0
  %114 = vmatprep.subr.bf16.mxu0 0
  %115 = vmatpush1.bf16.msra.mxu0 0
  %116 = vmatprep.subr.bf16.mxu0 0
  %117 = vmatpush1.bf16.msra.mxu0 0
  %118 = vmatprep.subr.bf16.mxu0 0
  %119 = vmatpush1.bf16.msra.mxu0 0
  %120 = vmatprep.subr.bf16.mxu0 0
  %121 = vmatpush1.bf16.msra.mxu0 0
  %122 = vmatprep.subr.bf16.mxu0 0
  %123 = vmatpush1.bf16.msra.mxu0 0
  %124 = vmatprep.subr.bf16.mxu0 0
  %125 = vmatpush1.bf16.msra.mxu0 0
  %126 = vmatprep.subr.bf16.mxu0 0
  %127 = vmatpush1.bf16.msra.mxu0 0
  %128 = vmatprep.mubr.bf16.mxu0 0
  %129 = vmatmul.mubr.bf16.gmra.mrb[0].mxu0 %v94
  %v130 = vpop.f32.mrb[0].mxu0
  %v131 = vadd.f32 %v79, %v130
  %v132 = vpop.f32.mrb[0].mxu0
  %v133 = vpop.f32.mrb[0].mxu0
  %v134 = vadd.f32 %v79, %v133
  %v135 = vpop.f32.mrb[0].mxu0
  %136 = vdwg.mxu0
  %v137 = vpack.c.bf16 %v134, %v131
  %v139 = vunpack.c.l.b16 %v137
  %v140 = vunpack.c.h.b16 %v137
  %v141 = vpack.c.b16 %v139, %v139
  %v142 = vpack.c.b16 %v140, %v140
  %vm145 = vcmask 781312
  %146 = vst.msk [vmem:[%s5] sm:$0xf] %vm145, %v141
  %147 = vst.msk [vmem:[%s5 + $0x4] sm:$0xf] %vm145, %v142
  // Predicated region
  $region22: #{_lambda_.6} parent=0 // pred_check
    _
  $region23: #{_lambda_.6} parent=0 // pred_check_branch
    %149 = sbr.rel (0) target = $region25
  $region24: #{_lambda_.6} parent=0 // pred_region
    _
  $region25: #{_lambda_.6} parent=0 // pred_fallthru
    _
  // Predicated region
  $region26: #{_lambda_.6} parent=0 // pred_check
    _
  $region27: #{_lambda_.6} parent=0 // pred_check_branch
    %151 = sbr.rel (0) target = $region29
  $region28: #{_lambda_.6} parent=0 // pred_region
    _
  $region29: #{_lambda_.6} parent=0 // pred_fallthru
    _

// kernel: _lambda_.7
$region0: #{_lambda_.7}
  #allocation0 [shape = 'u32[]', space=smem, size = 0x4, offset = 0x4, fixed_abs, tag = 'smem constant byte address 0x4 - core index']
  #allocation1 [shape = 'u32[144,128]{1,0:T(1,128)}', space=vmem, size = 0x12000, scoped, tag = 'internal scratch']
  %s0 = inlined_call_operand.vmem [shape: bf16[2,8,96], index: 0, kind: input, shape index: {}]
  %s1 = inlined_call_operand.vmem [shape: bf16[2,8,32], index: 1, kind: output, shape index: {}]
  %s2 = sld [smem:[#allocation0]]
  $region37: #{_lambda_.7} parent=0
    _
  %s4 = ssub.s32 1, %s2
  %s5 = scalar_select 0, %s4, %s2
  loop: start=0, step=1, limit=4
  $region2: #{_lambda_.7} parent=0 // loop_pre_header
    _
  $region3: #{_lambda_.7} parent=0 // loop_header
    %s7 = sphi 0, %s11
    %p8 = scmp.ge.s32.totalorder %s7, 4
    %s17 = sphi 0, %s19
    %s20 = sphi 0, %s17
    %s21 = sphi 0, %s20
    %s37 = sphi 0, %s21
    %s43 = sphi 0, %s45
    %s46 = sphi 0, %s43
    %s47 = sphi 0, %s46
    %s63 = sphi 0, %s47
  $region4: #{_lambda_.7} parent=0 // loop_header_branch
    %10 = sbr.rel (%p8) target = $region8
  $region5: #{_lambda_.7} parent=0 // loop_body
    %s12 = ssub.s32 %s7, 1
    %s13 = ssub.s32 %s7, 2
    %s14 = sadd.s32 %s7, 1
    %s15 = ssub.s32 %s7, %s14
    %p16 = scmp.eq.s32.totalorder %s15, 0
    %s18 = sadd.s32 %s17, 1
    %s19 = scalar_select %p16, %s17, %s18
    %p22 = pneg %p16
    %p23 = scmp.eq.s32.totalorder %s7, 1
    %p24 = por %p22, %p23
    %p25 = scmp.ne.s32.totalorder %s17, %s20
    %p26 = scmp.eq.s32.totalorder %s7, 0
    %p27 = por %p25, %p26
    %p28 = scmp.ne.s32.totalorder %s17, %s20
    %p29 = scmp.eq.s32.totalorder %s12, 1
    %p30 = por %p28, %p29
    %p31 = scmp.ne.s32.totalorder %s20, %s21
    %p32 = scmp.eq.s32.totalorder %s12, 0
    %p33 = por %p31, %p32
    %p34 = scmp.ne.s32.totalorder %s20, %s21
    %p35 = scmp.eq.s32.totalorder %s13, 1
    %p36 = por %p34, %p35
    %p38 = scmp.ne.s32.totalorder %s21, %s37
    %p39 = scmp.eq.s32.totalorder %s13, 0
    %p40 = por %p38, %p39
    %s41 = ssub.s32 %s7, %s14
    %p42 = scmp.eq.s32.totalorder %s41, 0
    %s44 = sadd.s32 %s43, 1
    %s45 = scalar_select %p42, %s43, %s44
    %p48 = pneg %p42
    %p49 = scmp.eq.s32.totalorder %s7, 1
    %p50 = por %p48, %p49
    %p51 = scmp.ne.s32.totalorder %s43, %s46
    %p52 = scmp.eq.s32.totalorder %s7, 0
    %p53 = por %p51, %p52
    %p54 = scmp.ne.s32.totalorder %s43, %s46
    %p55 = scmp.eq.s32.totalorder %s12, 1
    %p56 = por %p54, %p55
    %p57 = scmp.ne.s32.totalorder %s46, %s47
    %p58 = scmp.eq.s32.totalorder %s12, 0
    %p59 = por %p57, %p58
    %p60 = scmp.ne.s32.totalorder %s46, %s47
    %p61 = scmp.eq.s32.totalorder %s13, 1
    %p62 = por %p60, %p61
    %p64 = scmp.ne.s32.totalorder %s47, %s63
    %p65 = scmp.eq.s32.totalorder %s13, 0
    %p66 = por %p64, %p65
    %p67 = scmp.le.s32.totalorder 1, %s7
    %p68 = scmp.lt.s32.totalorder %s7, 3
    %p69 = pnand %p67, %p68
    %p70 = pneg %p69
    // Predicated region
    $region9: #{_lambda_.7} parent=5 // pred_check
      _
    $region10: #{_lambda_.7} parent=5 // pred_check_branch
      %72 = sbr.rel (%p69) target = $region12
    $region11: #{_lambda_.7} parent=5 // pred_region
      %s73 = ssub.s32 %s7, 1
    $region12: #{_lambda_.7} parent=5 // pred_fallthru
      _
    %p74 = scmp.lt.s32.totalorder %s7, 2
    // Predicated region
    $region13: #{_lambda_.7} parent=5 // pred_check
      %p75 = pneg %p74
    $region14: #{_lambda_.7} parent=5 // pred_check_branch
      %77 = sbr.rel (%p75) target = $region16
    $region15: #{_lambda_.7} parent=5 // pred_region
      // Predicated region
      $region17: #{_lambda_.7} parent=15 // pred_check
        %p78 = pneg %p27
      $region18: #{_lambda_.7} parent=15 // pred_check_branch
        %80 = sbr.rel (%p78) target = $region20
      $region19: #{_lambda_.7} parent=15 // pred_region
        %p81 = scmp.lt.s32.totalorder %s7, 1
        %s82 = scalar_select %p81, %s7, 1
        %s83 = smul.addr %s82, 4
        %s84 = scalar_lea.vmem %s0, %s83
      $region20: #{_lambda_.7} parent=15 // pred_fallthru
        _
    $region16: #{_lambda_.7} parent=5 // pred_fallthru
      _
    %p85 = scmp.le.s32.totalorder 1, %s7
    %p86 = scmp.lt.s32.totalorder %s7, 3
    %p87 = pnand %p85, %p86
    %p88 = pneg %p87
    // Predicated region
    $region21: #{_lambda_.7} parent=5 // pred_check
      _
    $region22: #{_lambda_.7} parent=5 // pred_check_branch
      %90 = sbr.rel (%p87) target = $region24
    $region23: #{_lambda_.7} parent=5 // pred_region
      %s91 = ssub.s32 %s7, 1
      %p92 = scmp.lt.s32.totalorder %s12, 1
      %s93 = scalar_select %p92, %s12, 1
      %s94 = smul.addr %s93, 4
      %s95 = scalar_lea.vmem %s0, %s94
      %p96 = pneg %p33
      %p97 = pneg %p30
      %p98 = pneg %p59
      %p99 = pneg %p56
      %p100 = scmp.lt.s32.totalorder %s12, 1
      %s101 = scalar_select %p100, %s12, 1
      %s102 = smul.addr %s101, 4
      %s103 = scalar_lea.vmem %s1, %s102
      %p104 = scmp.lt.s32.totalorder %s12, 1
      %s105 = scalar_select %p104, %s12, 1
      %s106 = smul.addr %s105, 4
      %s107 = scalar_lea.vmem %s0, %s106
      %p108 = scmp.lt.s32.totalorder %s12, 1
      %s109 = scalar_select %p108, %s12, 1
      %s110 = smul.addr %s109, 4
      %s111 = scalar_lea.vmem %s1, %s110
      %v113 = vld [vmem:[%s107] sm:$0xf]
      %v115 = vunpack.c.l.b16 %v113
      %v116 = vpack.c.b16 %v115, %v115
      %117 = vrot.lane.b32.xlu0 %v116, 96
      %v118 = vpop.permute.xlu0 %117
      %vm119 = vcmask 64512
      %v121 = vsel %vm119, %v113, 0
      %v124 = vsel %vm119, %v118, 0
      %126 = vmatprep.subr.bf16.mxu0 0
      %127 = vmatpush1.bf16.xpose.msra.mxu0 %v124
      %128 = vmatprep.subr.bf16.mxu0 0
      %129 = vmatpush1.bf16.xpose.msra.mxu0 0
      %130 = vmatprep.subr.bf16.mxu0 0
      %131 = vmatpush1.bf16.xpose.msra.mxu0 0
      %132 = vmatprep.subr.bf16.mxu0 0
      %133 = vmatpush1.bf16.xpose.msra.mxu0 0
      %134 = vmatprep.subr.bf16.mxu0 0
      %135 = vmatpush1.bf16.xpose.msra.mxu0 0
      %136 = vmatprep.subr.bf16.mxu0 0
      %137 = vmatpush1.bf16.xpose.msra.mxu0 0
      %138 = vmatprep.subr.bf16.mxu0 0
      %139 = vmatpush1.bf16.xpose.msra.mxu0 0
      %140 = vmatprep.subr.bf16.mxu0 0
      %141 = vmatpush1.bf16.xpose.msra.mxu0 0
      %142 = vmatprep.subr.bf16.mxu0 0
      %143 = vmatpush1.bf16.xpose.msra.mxu0 0
      %144 = vmatprep.subr.bf16.mxu0 0
      %145 = vmatpush1.bf16.xpose.msra.mxu0 0
      %146 = vmatprep.subr.bf16.mxu0 0
      %147 = vmatpush1.bf16.xpose.msra.mxu0 0
      %148 = vmatprep.subr.bf16.mxu0 0
      %149 = vmatpush1.bf16.xpose.msra.mxu0 0
      %150 = vmatprep.subr.bf16.mxu0 0
      %151 = vmatpush1.bf16.xpose.msra.mxu0 0
      %152 = vmatprep.subr.bf16.mxu0 0
      %153 = vmatpush1.bf16.xpose.msra.mxu0 0
      %154 = vmatprep.subr.bf16.mxu0 0
      %155 = vmatpush1.bf16.xpose.msra.mxu0 0
      %156 = vmatprep.subr.bf16.mxu0 0
      %157 = vmatpush1.bf16.xpose.msra.mxu0 0
      %158 = vmatprep.mubr.bf16.mxu0 0
      %159 = vmatmul.mubr.bf16.gmra.mrb[0].mxu0 %v121
      %v160 = vpop.f32.mrb[0].mxu0
      %v161 = vadd.f32 0.0, %v160
      %v162 = vpop.f32.mrb[0].mxu0
      %v163 = vpop.f32.mrb[0].mxu0
      %v164 = vpop.f32.mrb[0].mxu0
      %165 = vdwg.mxu0
      %v166 = vsel %vm119, %v161, -inf
      %167 = vmax.xlane.f32.xlu0 %v166
      %v168 = vpop.xlane.xlu0 %167
      %v169 = vsub.f32 %v161, %v168
      %v170 = vmul.f32 %v169, 1.442695
      %v171 = vpow.pop %v170
      %v172 = vsel %vm119, %v171, 0.0
      %173 = vadd.xlane.f32.xlu0 %v172
      %v174 = vpop.xlane.xlu0 %173
      %v175 = vpack.c.bf16 %v171, %v171
      %176 = vrot.lane.b32.xlu0 %v116, 64
      %v177 = vpop.permute.xlu0 %176
      %v179 = vsel %vm119, %v175, 0
      %vm181 = vcmask 1043456
      %v183 = vsel %vm181, %v177, 0
      %185 = vmatprep.subr.bf16.mxu0 0
      %186 = vmatpush1.bf16.msra.mxu0 %v183
      %187 = vmatprep.subr.bf16.mxu0 0
      %188 = vmatpush1.bf16.msra.mxu0 0
      %189 = vmatprep.subr.bf16.mxu0 0
      %190 = vmatpush1.bf16.msra.mxu0 0
      %191 = vmatprep.subr.bf16.mxu0 0
      %192 = vmatpush1.bf16.msra.mxu0 0
      %193 = vmatprep.subr.bf16.mxu0 0
      %194 = vmatpush1.bf16.msra.mxu0 0
      %195 = vmatprep.subr.bf16.mxu0 0
      %196 = vmatpush1.bf16.msra.mxu0 0
      %197 = vmatprep.subr.bf16.mxu0 0
      %198 = vmatpush1.bf16.msra.mxu0 0
      %199 = vmatprep.subr.bf16.mxu0 0
      %200 = vmatpush1.bf16.msra.mxu0 0
      %201 = vmatprep.subr.bf16.mxu0 0
      %202 = vmatpush1.bf16.msra.mxu0 0
      %203 = vmatprep.subr.bf16.mxu0 0
      %204 = vmatpush1.bf16.msra.mxu0 0
      %205 = vmatprep.subr.bf16.mxu0 0
      %206 = vmatpush1.bf16.msra.mxu0 0
      %207 = vmatprep.subr.bf16.mxu0 0
      %208 = vmatpush1.bf16.msra.mxu0 0
      %209 = vmatprep.subr.bf16.mxu0 0
      %210 = vmatpush1.bf16.msra.mxu0 0
      %211 = vmatprep.subr.bf16.mxu0 0
      %212 = vmatpush1.bf16.msra.mxu0 0
      %213 = vmatprep.subr.bf16.mxu0 0
      %214 = vmatpush1.bf16.msra.mxu0 0
      %215 = vmatprep.subr.bf16.mxu0 0
      %216 = vmatpush1.bf16.msra.mxu0 0
      %217 = vmatprep.mubr.bf16.mxu0 0
      %218 = vmatmul.mubr.bf16.gmra.mrb[0].mxu0 %v179
      %v219 = vpop.f32.mrb[0].mxu0
      %v220 = vadd.f32 0.0, %v219
      %v221 = vpop.f32.mrb[0].mxu0
      %v222 = vpop.f32.mrb[0].mxu0
      %v223 = vpop.f32.mrb[0].mxu0
      %224 = vdwg.mxu0
      %v225 = vrcp.pop %v174
      %v226 = vmul.f32 %v220, %v225
      %v227 = vpack.c.bf16 %v226, %v226
      %vm228 = vcmask 60416
      %229 = vst.msk [vmem:[%s111] sm:$0xf] %vm228, %v227
      %v230 = vld [vmem:[%s107] sm:$0xf]
      %v232 = vunpack.c.l.b16 %v230
      %v233 = vpack.c.b16 %v232, %v232
      %234 = vrot.lane.b32.xlu0 %v233, 120
      %v235 = vpop.permute.xlu0 %234
      %236 = vrot.lane.b32.xlu0 %v233, 88
      %v237 = vpop.permute.xlu0 %236
      %v239 = vsel %vm119, %v235, 0
      %v242 = vsel %vm119, %v237, 0
      %244 = vmatprep.subr.bf16.mxu0 0
      %245 = vmatpush1.bf16.xpose.msra.mxu0 %v242
      %246 = vmatprep.subr.bf16.mxu0 0
      %247 = vmatpush1.bf16.xpose.msra.mxu0 0
      %248 = vmatprep.subr.bf16.mxu0 0
      %249 = vmatpush1.bf16.xpose.msra.mxu0 0
      %250 = vmatprep.subr.bf16.mxu0 0
      %251 = vmatpush1.bf16.xpose.msra.mxu0 0
      %252 = vmatprep.subr.bf16.mxu0 0
      %253 = vmatpush1.bf16.xpose.msra.mxu0 0
      %254 = vmatprep.subr.bf16.mxu0 0
      %255 = vmatpush1.bf16.xpose.msra.mxu0 0
      %256 = vmatprep.subr.bf16.mxu0 0
      %257 = vmatpush1.bf16.xpose.msra.mxu0 0
      %258 = vmatprep.subr.bf16.mxu0 0
      %259 = vmatpush1.bf16.xpose.msra.mxu0 0
      %260 = vmatprep.subr.bf16.mxu0 0
      %261 = vmatpush1.bf16.xpose.msra.mxu0 0
      %262 = vmatprep.subr.bf16.mxu0 0
      %263 = vmatpush1.bf16.xpose.msra.mxu0 0
      %264 = vmatprep.subr.bf16.mxu0 0
      %265 = vmatpush1.bf16.xpose.msra.mxu0 0
      %266 = vmatprep.subr.bf16.mxu0 0
      %267 = vmatpush1.bf16.xpose.msra.mxu0 0
      %268 = vmatprep.subr.bf16.mxu0 0
      %269 = vmatpush1.bf16.xpose.msra.mxu0 0
      %270 = vmatprep.subr.bf16.mxu0 0
      %271 = vmatpush1.bf16.xpose.msra.mxu0 0
      %272 = vmatprep.subr.bf16.mxu0 0
      %273 = vmatpush1.bf16.xpose.msra.mxu0 0
      %274 = vmatprep.subr.bf16.mxu0 0
      %275 = vmatpush1.bf16.xpose.msra.mxu0 0
      %276 = vmatprep.mubr.bf16.mxu0 0
      %277 = vmatmul.mubr.bf16.gmra.mrb[0].mxu0 %v239
      %v278 = vpop.f32.mrb[0].mxu0
      %v279 = vadd.f32 0.0, %v278
      %v280 = vpop.f32.mrb[0].mxu0
      %v281 = vpop.f32.mrb[0].mxu0
      %v282 = vpop.f32.mrb[0].mxu0
      %283 = vdwg.mxu0
      %v284 = vsel %vm119, %v279, -inf
      %285 = vmax.xlane.f32.xlu0 %v284
      %v286 = vpop.xlane.xlu0 %285
      %v287 = vsub.f32 %v279, %v286
      %v288 = vmul.f32 %v287, 1.442695
      %v289 = vpow.pop %v288
      %v290 = vsel %vm119, %v289, 0.0
      %291 = vadd.xlane.f32.xlu0 %v290
      %v292 = vpop.xlane.xlu0 %291
      %v293 = vpack.c.bf16 %v289, %v289
      %294 = vrot.lane.b32.xlu0 %v233, 56
      %v295 = vpop.permute.xlu0 %294
      %v297 = vsel %vm119, %v293, 0
      %v300 = vsel %vm181, %v295, 0
      %302 = vmatprep.subr.bf16.mxu0 0
      %303 = vmatpush1.bf16.msra.mxu0 %v300
      %304 = vmatprep.subr.bf16.mxu0 0
      %305 = vmatpush1.bf16.msra.mxu0 0
      %306 = vmatprep.subr.bf16.mxu0 0
      %307 = vmatpush1.bf16.msra.mxu0 0
      %308 = vmatprep.subr.bf16.mxu0 0
      %309 = vmatpush1.bf16.msra.mxu0 0
      %310 = vmatprep.subr.bf16.mxu0 0
      %311 = vmatpush1.bf16.msra.mxu0 0
      %312 = vmatprep.subr.bf16.mxu0 0
      %313 = vmatpush1.bf16.msra.mxu0 0
      %314 = vmatprep.subr.bf16.mxu0 0
      %315 = vmatpush1.bf16.msra.mxu0 0
      %316 = vmatprep.subr.bf16.mxu0 0
      %317 = vmatpush1.bf16.msra.mxu0 0
      %318 = vmatprep.subr.bf16.mxu0 0
      %319 = vmatpush1.bf16.msra.mxu0 0
      %320 = vmatprep.subr.bf16.mxu0 0
      %321 = vmatpush1.bf16.msra.mxu0 0
      %322 = vmatprep.subr.bf16.mxu0 0
      %323 = vmatpush1.bf16.msra.mxu0 0
      %324 = vmatprep.subr.bf16.mxu0 0
      %325 = vmatpush1.bf16.msra.mxu0 0
      %326 = vmatprep.subr.bf16.mxu0 0
      %327 = vmatpush1.bf16.msra.mxu0 0
      %328 = vmatprep.subr.bf16.mxu0 0
      %329 = vmatpush1.bf16.msra.mxu0 0
      %330 = vmatprep.subr.bf16.mxu0 0
      %331 = vmatpush1.bf16.msra.mxu0 0
      %332 = vmatprep.subr.bf16.mxu0 0
      %333 = vmatpush1.bf16.msra.mxu0 0
      %334 = vmatprep.mubr.bf16.mxu0 0
      %335 = vmatmul.mubr.bf16.gmra.mrb[0].mxu0 %v297
      %v336 = vpop.f32.mrb[0].mxu0
      %v337 = vadd.f32 0.0, %v336
      %v338 = vpop.f32.mrb[0].mxu0
      %v339 = vpop.f32.mrb[0].mxu0
      %v340 = vpop.f32.mrb[0].mxu0
      %341 = vdwg.mxu0
      %v342 = vrcp.pop %v292
      %v343 = vmul.f32 %v337, %v342
      %v344 = vpack.c.bf16 %v343, %v343
      %v346 = vunpack.c.l.b16 %v344
      %v347 = vpack.c.b16 %v346, %v346
      %348 = vrot.lane.b32.xlu0 %v347, 8
      %v349 = vpop.permute.xlu0 %348
      %vm351 = vcmask 126016
      %352 = vst.msk [vmem:[%s111] sm:$0xf] %vm351, %v349
      %v353 = vld [vmem:[%s107] sm:$0xf]
      %v355 = vunpack.c.l.b16 %v353
      %v356 = vpack.c.b16 %v355, %v355
      %357 = vrot.lane.b32.xlu0 %v356, 112
      %v358 = vpop.permute.xlu0 %357
      %359 = vrot.lane.b32.xlu0 %v356, 80
      %v360 = vpop.permute.xlu0 %359
      %v362 = vsel %vm119, %v358, 0
      %v365 = vsel %vm119, %v360, 0
      %367 = vmatprep.subr.bf16.mxu0 0
      %368 = vmatpush1.bf16.xpose.msra.mxu0 %v365
      %369 = vmatprep.subr.bf16.mxu0 0
      %370 = vmatpush1.bf16.xpose.msra.mxu0 0
      %371 = vmatprep.subr.bf16.mxu0 0
      %372 = vmatpush1.bf16.xpose.msra.mxu0 0
      %373 = vmatprep.subr.bf16.mxu0 0
      %374 = vmatpush1.bf16.xpose.msra.mxu0 0
      %375 = vmatprep.subr.bf16.mxu0 0
      %376 = vmatpush1.bf16.xpose.msra.mxu0 0
      %377 = vmatprep.subr.bf16.mxu0 0
      %378 = vmatpush1.bf16.xpose.msra.mxu0 0
      %379 = vmatprep.subr.bf16.mxu0 0
      %380 = vmatpush1.bf16.xpose.msra.mxu0 0
      %381 = vmatprep.subr.bf16.mxu0 0
      %382 = vmatpush1.bf16.xpose.msra.mxu0 0
      %383 = vmatprep.subr.bf16.mxu0 0
      %384 = vmatpush1.bf16.xpose.msra.mxu0 0
      %385 = vmatprep.subr.bf16.mxu0 0
      %386 = vmatpush1.bf16.xpose.msra.mxu0 0
      %387 = vmatprep.subr.bf16.mxu0 0
      %388 = vmatpush1.bf16.xpose.msra.mxu0 0
      %389 = vmatprep.subr.bf16.mxu0 0
      %390 = vmatpush1.bf16.xpose.msra.mxu0 0
      %391 = vmatprep.subr.bf16.mxu0 0
      %392 = vmatpush1.bf16.xpose.msra.mxu0 0
      %393 = vmatprep.subr.bf16.mxu0 0
      %394 = vmatpush1.bf16.xpose.msra.mxu0 0
      %395 = vmatprep.subr.bf16.mxu0 0
      %396 = vmatpush1.bf16.xpose.msra.mxu0 0
      %397 = vmatprep.subr.bf16.mxu0 0
      %398 = vmatpush1.bf16.xpose.msra.mxu0 0
      %399 = vmatprep.mubr.bf16.mxu0 0
      %400 = vmatmul.mubr.bf16.gmra.mrb[0].mxu0 %v362
      %v401 = vpop.f32.mrb[0].mxu0
      %v402 = vadd.f32 0.0, %v401
      %v403 = vpop.f32.mrb[0].mxu0
      %v404 = vpop.f32.mrb[0].mxu0
      %v405 = vpop.f32.mrb[0].mxu0
      %406 = vdwg.mxu0
      %v407 = vsel %vm119, %v402, -inf
      %408 = vmax.xlane.f32.xlu0 %v407
      %v409 = vpop.xlane.xlu0 %408
      %v410 = vsub.f32 %v402, %v409
      %v411 = vmul.f32 %v410, 1.442695
      %v412 = vpow.pop %v411
      %v413 = vsel %vm119, %v412, 0.0
      %414 = vadd.xlane.f32.xlu0 %v413
      %v415 = vpop.xlane.xlu0 %414
      %v416 = vpack.c.bf16 %v412, %v412
      %417 = vrot.lane.b32.xlu0 %v356, 48
      %v418 = vpop.permute.xlu0 %417
      %v420 = vsel %vm119, %v416, 0
      %v423 = vsel %vm181, %v418, 0
      %425 = vmatprep.subr.bf16.mxu0 0
      %426 = vmatpush1.bf16.msra.mxu0 %v423
      %427 = vmatprep.subr.bf16.mxu0 0
      %428 = vmatpush1.bf16.msra.mxu0 0
      %429 = vmatprep.subr.bf16.mxu0 0
      %430 = vmatpush1.bf16.msra.mxu0 0
      %431 = vmatprep.subr.bf16.mxu0 0
      %432 = vmatpush1.bf16.msra.mxu0 0
      %433 = vmatprep.subr.bf16.mxu0 0
      %434 = vmatpush1.bf16.msra.mxu0 0
      %435 = vmatprep.subr.bf16.mxu0 0
      %436 = vmatpush1.bf16.msra.mxu0 0
      %437 = vmatprep.subr.bf16.mxu0 0
      %438 = vmatpush1.bf16.msra.mxu0 0
      %439 = vmatprep.subr.bf16.mxu0 0
      %440 = vmatpush1.bf16.msra.mxu0 0
      %441 = vmatprep.subr.bf16.mxu0 0
      %442 = vmatpush1.bf16.msra.mxu0 0
      %443 = vmatprep.subr.bf16.mxu0 0
      %444 = vmatpush1.bf16.msra.mxu0 0
      %445 = vmatprep.subr.bf16.mxu0 0
      %446 = vmatpush1.bf16.msra.mxu0 0
      %447 = vmatprep.subr.bf16.mxu0 0
      %448 = vmatpush1.bf16.msra.mxu0 0
      %449 = vmatprep.subr.bf16.mxu0 0
      %450 = vmatpush1.bf16.msra.mxu0 0
      %451 = vmatprep.subr.bf16.mxu0 0
      %452 = vmatpush1.bf16.msra.mxu0 0
      %453 = vmatprep.subr.bf16.mxu0 0
      %454 = vmatpush1.bf16.msra.mxu0 0
      %455 = vmatprep.subr.bf16.mxu0 0
      %456 = vmatpush1.bf16.msra.mxu0 0
      %457 = vmatprep.mubr.bf16.mxu0 0
      %458 = vmatmul.mubr.bf16.gmra.mrb[0].mxu0 %v420
      %v459 = vpop.f32.mrb[0].mxu0
      %v460 = vadd.f32 0.0, %v459
      %v461 = vpop.f32.mrb[0].mxu0
      %v462 = vpop.f32.mrb[0].mxu0
      %v463 = vpop.f32.mrb[0].mxu0
      %464 = vdwg.mxu0
      %v465 = vrcp.pop %v415
      %v466 = vmul.f32 %v460, %v465
      %v467 = vpack.c.bf16 %v466, %v466
      %v469 = vunpack.c.l.b16 %v467
      %v470 = vpack.c.b16 %v469, %v469
      %471 = vrot.lane.b32.xlu0 %v470, 16
      %v472 = vpop.permute.xlu0 %471
      %vm474 = vcmask 191616
      %475 = vst.msk [vmem:[%s111] sm:$0xf] %vm474, %v472
      %v476 = vld [vmem:[%s107] sm:$0xf]
      %v478 = vunpack.c.l.b16 %v476
      %v479 = vpack.c.b16 %v478, %v478
      %480 = vrot.lane.b32.xlu0 %v479, 104
      %v481 = vpop.permute.xlu0 %480
      %482 = vrot.lane.b32.xlu0 %v479, 72
      %v483 = vpop.permute.xlu0 %482
      %v485 = vsel %vm119, %v481, 0
      %v488 = vsel %vm119, %v483, 0
      %490 = vmatprep.subr.bf16.mxu0 0
      %491 = vmatpush1.bf16.xpose.msra.mxu0 %v488
      %492 = vmatprep.subr.bf16.mxu0 0
      %493 = vmatpush1.bf16.xpose.msra.mxu0 0
      %494 = vmatprep.subr.bf16.mxu0 0
      %495 = vmatpush1.bf16.xpose.msra.mxu0 0
      %496 = vmatprep.subr.bf16.mxu0 0
      %497 = vmatpush1.bf16.xpose.msra.mxu0 0
      %498 = vmatprep.subr.bf16.mxu0 0
      %499 = vmatpush1.bf16.xpose.msra.mxu0 0
      %500 = vmatprep.subr.bf16.mxu0 0
      %501 = vmatpush1.bf16.xpose.msra.mxu0 0
      %502 = vmatprep.subr.bf16.mxu0 0
      %503 = vmatpush1.bf16.xpose.msra.mxu0 0
      %504 = vmatprep.subr.bf16.mxu0 0
      %505 = vmatpush1.bf16.xpose.msra.mxu0 0
      %506 = vmatprep.subr.bf16.mxu0 0
      %507 = vmatpush1.bf16.xpose.msra.mxu0 0
      %508 = vmatprep.subr.bf16.mxu0 0
      %509 = vmatpush1.bf16.xpose.msra.mxu0 0
      %510 = vmatprep.subr.bf16.mxu0 0
      %511 = vmatpush1.bf16.xpose.msra.mxu0 0
      %512 = vmatprep.subr.bf16.mxu0 0
      %513 = vmatpush1.bf16.xpose.msra.mxu0 0
      %514 = vmatprep.subr.bf16.mxu0 0
      %515 = vmatpush1.bf16.xpose.msra.mxu0 0
      %516 = vmatprep.subr.bf16.mxu0 0
      %517 = vmatpush1.bf16.xpose.msra.mxu0 0
      %518 = vmatprep.subr.bf16.mxu0 0
      %519 = vmatpush1.bf16.xpose.msra.mxu0 0
      %520 = vmatprep.subr.bf16.mxu0 0
      %521 = vmatpush1.bf16.xpose.msra.mxu0 0
      %522 = vmatprep.mubr.bf16.mxu0 0
      %523 = vmatmul.mubr.bf16.gmra.mrb[0].mxu0 %v485
      %v524 = vpop.f32.mrb[0].mxu0
      %v525 = vadd.f32 0.0, %v524
      %v526 = vpop.f32.mrb[0].mxu0
      %v527 = vpop.f32.mrb[0].mxu0
      %v528 = vpop.f32.mrb[0].mxu0
      %529 = vdwg.mxu0
      %v530 = vsel %vm119, %v525, -inf
      %531 = vmax.xlane.f32.xlu0 %v530
      %v532 = vpop.xlane.xlu0 %531
      %v533 = vsub.f32 %v525, %v532
      %v534 = vmul.f32 %v533, 1.442695
      %v535 = vpow.pop %v534
      %v536 = vsel %vm119, %v535, 0.0
      %537 = vadd.xlane.f32.xlu0 %v536
      %v538 = vpop.xlane.xlu0 %537
      %v539 = vpack.c.bf16 %v535, %v535
      %540 = vrot.lane.b32.xlu0 %v479, 40
      %v541 = vpop.permute.xlu0 %540
      %v543 = vsel %vm119, %v539, 0
      %v546 = vsel %vm181, %v541, 0
      %548 = vmatprep.subr.bf16.mxu0 0
      %549 = vmatpush1.bf16.msra.mxu0 %v546
      %550 = vmatprep.subr.bf16.mxu0 0
      %551 = vmatpush1.bf16.msra.mxu0 0
      %552 = vmatprep.subr.bf16.mxu0 0
      %553 = vmatpush1.bf16.msra.mxu0 0
      %554 = vmatprep.subr.bf16.mxu0 0
      %555 = vmatpush1.bf16.msra.mxu0 0
      %556 = vmatprep.subr.bf16.mxu0 0
      %557 = vmatpush1.bf16.msra.mxu0 0
      %558 = vmatprep.subr.bf16.mxu0 0
      %559 = vmatpush1.bf16.msra.mxu0 0
      %560 = vmatprep.subr.bf16.mxu0 0
      %561 = vmatpush1.bf16.msra.mxu0 0
      %562 = vmatprep.subr.bf16.mxu0 0
      %563 = vmatpush1.bf16.msra.mxu0 0
      %564 = vmatprep.subr.bf16.mxu0 0
      %565 = vmatpush1.bf16.msra.mxu0 0
      %566 = vmatprep.subr.bf16.mxu0 0
      %567 = vmatpush1.bf16.msra.mxu0 0
      %568 = vmatprep.subr.bf16.mxu0 0
      %569 = vmatpush1.bf16.msra.mxu0 0
      %570 = vmatprep.subr.bf16.mxu0 0
      %571 = vmatpush1.bf16.msra.mxu0 0
      %572 = vmatprep.subr.bf16.mxu0 0
      %573 = vmatpush1.bf16.msra.mxu0 0
      %574 = vmatprep.subr.bf16.mxu0 0
      %575 = vmatpush1.bf16.msra.mxu0 0
      %576 = vmatprep.subr.bf16.mxu0 0
      %577 = vmatpush1.bf16.msra.mxu0 0
      %578 = vmatprep.subr.bf16.mxu0 0
      %579 = vmatpush1.bf16.msra.mxu0 0
      %580 = vmatprep.mubr.bf16.mxu0 0
      %581 = vmatmul.mubr.bf16.gmra.mrb[0].mxu0 %v543
      %v582 = vpop.f32.mrb[0].mxu0
      %v583 = vadd.f32 0.0, %v582
      %v584 = vpop.f32.mrb[0].mxu0
      %v585 = vpop.f32.mrb[0].mxu0
      %v586 = vpop.f32.mrb[0].mxu0
      %587 = vdwg.mxu0
      %v588 = vrcp.pop %v538
      %v589 = vmul.f32 %v583, %v588
      %v590 = vpack.c.bf16 %v589, %v589
      %v592 = vunpack.c.l.b16 %v590
      %v593 = vpack.c.b16 %v592, %v592
      %594 = vrot.lane.b32.xlu0 %v593, 24
      %v595 = vpop.permute.xlu0 %594
      %vm597 = vcmask 257216
      %598 = vst.msk [vmem:[%s111] sm:$0xf] %vm597, %v595
      %p599 = scmp.lt.s32.totalorder %s12, 1
      %s600 = scalar_select %p599, %s12, 1
      %s601 = smul.addr %s600, 4
      %s602 = scalar_lea.vmem %s1, %s601
      // Predicated region
      $region25: #{_lambda_.7} parent=23 // pred_check
        %p603 = pneg %p56
      $region26: #{_lambda_.7} parent=23 // pred_check_branch
        %605 = sbr.rel (%p603) target = $region28
      $region27: #{_lambda_.7} parent=23 // pred_region
        _
      $region28: #{_lambda_.7} parent=23 // pred_fallthru
        _
    $region24: #{_lambda_.7} parent=5 // pred_fallthru
      _
    %p606 = scmp.le.s32.totalorder 2, %s7
    // Predicated region
    $region29: #{_lambda_.7} parent=5 // pred_check
      %p607 = pneg %p606
    $region30: #{_lambda_.7} parent=5 // pred_check_branch
      %609 = sbr.rel (%p607) target = $region32
    $region31: #{_lambda_.7} parent=5 // pred_region
      %s610 = ssub.s32 %s7, 2
      // Predicated region
      $region33: #{_lambda_.7} parent=31 // pred_check
        %p611 = pneg %p62
      $region34: #{_lambda_.7} parent=31 // pred_check_branch
        %613 = sbr.rel (%p611) target = $region36
      $region35: #{_lambda_.7} parent=31 // pred_region
        %p614 = scmp.lt.s32.totalorder %s13, 1
        %s615 = scalar_select %p614, %s13, 1
        %s616 = smul.addr %s615, 4
        %s617 = scalar_lea.vmem %s1, %s616
      $region36: #{_lambda_.7} parent=31 // pred_fallthru
        _
    $region32: #{_lambda_.7} parent=5 // pred_fallthru
      _
  $region6: #{_lambda_.7} parent=0 // loop_footer
    %s11 = sadd.s32 1, %s7
  $region7: #{_lambda_.7} parent=0 // loop_footer_branch
    %6 = sbr.rel target = $region3
  $region8: #{_lambda_.7} parent=0 // loop_exit
    _

// kernel: _lambda_.8
$region0: #{_lambda_.8}
  #allocation0 [shape = 'u32[]', space=smem, size = 0x4, offset = 0x4, fixed_abs, tag = 'smem constant byte address 0x4 - core index']
  #allocation1 [shape = 'u32[144,128]{1,0:T(1,128)}', space=vmem, size = 0x12000, scoped, tag = 'internal scratch']
  %s0 = inlined_call_operand.vmem [shape: f32[16,32], index: 0, kind: input, shape index: {}]
  %s1 = inlined_call_operand.vmem [shape: bf16[16,32], index: 1, kind: input, shape index: {}]
  %s2 = inlined_call_operand.vmem [shape: bf16[32,32], index: 2, kind: input, shape index: {}]
  %s3 = inlined_call_operand.vmem [shape: f32[1,32], index: 3, kind: input, shape index: {}, may-alias: {3,5,9}]
  %s4 = inlined_call_operand.vmem [shape: f32[1,32], index: 4, kind: input, shape index: {}]
  %s5 = inlined_call_operand.vmem [shape: f32[1,32], index: 5, kind: input, shape index: {}, may-alias: {3,5,9}]
  %s6 = inlined_call_operand.vmem [shape: bf16[32,128], index: 6, kind: input, shape index: {}]
  %s7 = inlined_call_operand.vmem [shape: f32[1,128], index: 7, kind: input, shape index: {}]
  %s8 = inlined_call_operand.vmem [shape: bf16[128,32], index: 8, kind: input, shape index: {}]
  %s9 = inlined_call_operand.vmem [shape: f32[1,32], index: 9, kind: input, shape index: {}, may-alias: {3,5,9}]
  %s10 = inlined_call_operand.vmem [shape: f32[16,32], index: 10, kind: output, shape index: {}]
  %s11 = sld [smem:[#allocation0]]
  $region50: #{_lambda_.8} parent=0
    _
  %s13 = ssub.s32 1, %s11
  %s14 = scalar_select 0, %s13, %s11
  // Predicated region
  $region2: #{_lambda_.8} parent=0 // pred_check
    _
  $region3: #{_lambda_.8} parent=0 // pred_check_branch
    %16 = sbr.rel (0) target = $region5
  $region4: #{_lambda_.8} parent=0 // pred_region
    _
  $region5: #{_lambda_.8} parent=0 // pred_fallthru
    _
  // Predicated region
  $region6: #{_lambda_.8} parent=0 // pred_check
    _
  $region7: #{_lambda_.8} parent=0 // pred_check_branch
    %18 = sbr.rel (0) target = $region9
  $region8: #{_lambda_.8} parent=0 // pred_region
    _
  $region9: #{_lambda_.8} parent=0 // pred_fallthru
    _
  // Predicated region
  $region10: #{_lambda_.8} parent=0 // pred_check
    _
  $region11: #{_lambda_.8} parent=0 // pred_check_branch
    %20 = sbr.rel (0) target = $region13
  $region12: #{_lambda_.8} parent=0 // pred_region
    _
  $region13: #{_lambda_.8} parent=0 // pred_fallthru
    _
  // Predicated region
  $region14: #{_lambda_.8} parent=0 // pred_check
    _
  $region15: #{_lambda_.8} parent=0 // pred_check_branch
    %22 = sbr.rel (0) target = $region17
  $region16: #{_lambda_.8} parent=0 // pred_region
    _
  $region17: #{_lambda_.8} parent=0 // pred_fallthru
    _
  // Predicated region
  $region18: #{_lambda_.8} parent=0 // pred_check
    _
  $region19: #{_lambda_.8} parent=0 // pred_check_branch
    %24 = sbr.rel (0) target = $region21
  $region20: #{_lambda_.8} parent=0 // pred_region
    _
  $region21: #{_lambda_.8} parent=0 // pred_fallthru
    _
  // Predicated region
  $region22: #{_lambda_.8} parent=0 // pred_check
    _
  $region23: #{_lambda_.8} parent=0 // pred_check_branch
    %26 = sbr.rel (0) target = $region25
  $region24: #{_lambda_.8} parent=0 // pred_region
    _
  $region25: #{_lambda_.8} parent=0 // pred_fallthru
    _
  // Predicated region
  $region26: #{_lambda_.8} parent=0 // pred_check
    _
  $region27: #{_lambda_.8} parent=0 // pred_check_branch
    %28 = sbr.rel (0) target = $region29
  $region28: #{_lambda_.8} parent=0 // pred_region
    _
  $region29: #{_lambda_.8} parent=0 // pred_fallthru
    _
  // Predicated region
  $region30: #{_lambda_.8} parent=0 // pred_check
    _
  $region31: #{_lambda_.8} parent=0 // pred_check_branch
    %30 = sbr.rel (0) target = $region33
  $region32: #{_lambda_.8} parent=0 // pred_region
    _
  $region33: #{_lambda_.8} parent=0 // pred_fallthru
    _
  // Predicated region
  $region34: #{_lambda_.8} parent=0 // pred_check
    _
  $region35: #{_lambda_.8} parent=0 // pred_check_branch
    %32 = sbr.rel (0) target = $region37
  $region36: #{_lambda_.8} parent=0 // pred_region
    _
  $region37: #{_lambda_.8} parent=0 // pred_fallthru
    _
  // Predicated region
  $region38: #{_lambda_.8} parent=0 // pred_check
    _
  $region39: #{_lambda_.8} parent=0 // pred_check_branch
    %34 = sbr.rel (0) target = $region41
  $region40: #{_lambda_.8} parent=0 // pred_region
    _
  $region41: #{_lambda_.8} parent=0 // pred_fallthru
    _
  %v36 = vld [vmem:[%s0] sm:$0xff]
  %v37 = vld [vmem:[%s0 + $0x8] sm:$0xff]
  %v38 = vld [vmem:[%s1] sm:$0xf]
  %v39 = vld [vmem:[%s1 + $0x4] sm:$0xf]
  %v40 = vld [vmem:[%s2] sm:$0xf]
  %v41 = vld [vmem:[%s2 + $0x4] sm:$0xf]
  %v42 = vld [vmem:[%s2 + $0x8] sm:$0xf]
  %v43 = vld [vmem:[%s2 + $0xc] sm:$0xf]
  %v46 = vunpack.c.l.b16 %v38
  %v47 = vunpack.c.l.b16 %v39
  %v48 = vpack.c.b16 %v47, %v46
  %v53 = vunpack.c.l.b16 %v40
  %v54 = vunpack.c.l.b16 %v41
  %v55 = vunpack.c.l.b16 %v42
  %v56 = vunpack.c.l.b16 %v43
  %v57 = vpack.c.b16 %v54, %v53
  %v58 = vpack.c.b16 %v56, %v55
  %vm61 = vcmask 261120
  %v63 = vsel %vm61, %v48, 0
  %65 = vmatprep.subr.bf16.mxu0 0
  %66 = vmatpush1.bf16.msra.mxu0 %v57
  %67 = vmatprep.subr.bf16.mxu0 0
  %68 = vmatpush1.bf16.msra.mxu0 %v58
  %69 = vmatprep.subr.bf16.mxu0 0
  %70 = vmatpush1.bf16.msra.mxu0 0
  %71 = vmatprep.subr.bf16.mxu0 0
  %72 = vmatpush1.bf16.msra.mxu0 0
  %73 = vmatprep.subr.bf16.mxu0 0
  %74 = vmatpush1.bf16.msra.mxu0 0
  %75 = vmatprep.subr.bf16.mxu0 0
  %76 = vmatpush1.bf16.msra.mxu0 0
  %77 = vmatprep.subr.bf16.mxu0 0
  %78 = vmatpush1.bf16.msra.mxu0 0
  %79 = vmatprep.subr.bf16.mxu0 0
  %80 = vmatpush1.bf16.msra.mxu0 0
  %81 = vmatprep.subr.bf16.mxu0 0
  %82 = vmatpush1.bf16.msra.mxu0 0
  %83 = vmatprep.subr.bf16.mxu0 0
  %84 = vmatpush1.bf16.msra.mxu0 0
  %85 = vmatprep.subr.bf16.mxu0 0
  %86 = vmatpush1.bf16.msra.mxu0 0
  %87 = vmatprep.subr.bf16.mxu0 0
  %88 = vmatpush1.bf16.msra.mxu0 0
  %89 = vmatprep.subr.bf16.mxu0 0
  %90 = vmatpush1.bf16.msra.mxu0 0
  %91 = vmatprep.subr.bf16.mxu0 0
  %92 = vmatpush1.bf16.msra.mxu0 0
  %93 = vmatprep.subr.bf16.mxu0 0
  %94 = vmatpush1.bf16.msra.mxu0 0
  %95 = vmatprep.subr.bf16.mxu0 0
  %96 = vmatpush1.bf16.msra.mxu0 0
  %97 = vmatprep.mubr.bf16.mxu0 0
  %98 = vmatmul.mubr.bf16.gmra.mrb[0].mxu0 %v63
  %v99 = vpop.f32.mrb[0].mxu0
  %v100 = vadd.f32 0.0, %v99
  %v101 = vpop.f32.mrb[0].mxu0
  %v102 = vpop.f32.mrb[0].mxu0
  %v103 = vadd.f32 0.0, %v102
  %v104 = vpop.f32.mrb[0].mxu0
  %105 = vdwg.mxu0
  %v106 = vadd.f32 %v36, %v100
  %v107 = vadd.f32 %v37, %v103
  %v108 = vld [vmem:[%s3] sm:$0x1]
  %v110 = vlaneseq
  %v111 = vshrl.u32 %v110, 7
  %v112 = vsub.s32 0, %v111
  %v113 = vrot.slane %v108, %v112
  %v115 = vadd.f32 %v106, %v113
  %v116 = vadd.f32 %v107, %v113
  %v117 = vsel %vm61, %v115, 0.0
  %118 = vadd.xlane.f32.xlu0 %v117
  %v119 = vpop.xlane.xlu0 %118
  %v120 = vsel %vm61, %v116, 0.0
  %121 = vadd.xlane.f32.xlu0 %v120
  %v122 = vpop.xlane.xlu0 %121
  %v123 = vrcp.pop 32.0
  %v124 = vmul.f32 %v119, %v123
  %v125 = vmul.f32 %v122, %v123
  %v126 = vsub.f32 %v115, %v124
  %v127 = vsub.f32 %v116, %v125
  %v128 = vmul.f32 %v126, %v126
  %v129 = vmul.f32 %v127, %v127
  %v130 = vsel %vm61, %v128, 0.0
  %131 = vadd.xlane.f32.xlu0 %v130
  %v132 = vpop.xlane.xlu0 %131
  %v133 = vsel %vm61, %v129, 0.0
  %134 = vadd.xlane.f32.xlu0 %v133
  %v135 = vpop.xlane.xlu0 %134
  %v136 = vmul.f32 %v132, %v123
  %v137 = vmul.f32 %v135, %v123
  %v138 = vadd.f32 %v136, 1e-05
  %v139 = vadd.f32 %v137, 1e-05
  %v140 = vrsqrt.pop %v138
  %v141 = vrsqrt.pop %v139
  %v142 = vmul.f32 %v126, %v140
  %v143 = vmul.f32 %v127, %v141
  %v144 = vld [vmem:[%s4] sm:$0x1]
  %v146 = vlaneseq
  %v147 = vshrl.u32 %v146, 7
  %v148 = vsub.s32 0, %v147
  %v149 = vrot.slane %v144, %v148
  %v151 = vmul.f32 %v142, %v149
  %v152 = vmul.f32 %v143, %v149
  %v153 = vld [vmem:[%s5] sm:$0x1]
  %v155 = vlaneseq
  %v156 = vshrl.u32 %v155, 7
  %v157 = vsub.s32 0, %v156
  %v158 = vrot.slane %v153, %v157
  %v160 = vadd.f32 %v151, %v158
  %v161 = vadd.f32 %v152, %v158
  %v162 = vpack.c.bf16 %v161, %v160
  %v163 = vld [vmem:[%s6] sm:$0xf]
  %v164 = vld [vmem:[%s6 + $0x4] sm:$0xf]
  %v165 = vld [vmem:[%s6 + $0x8] sm:$0xf]
  %v166 = vld [vmem:[%s6 + $0xc] sm:$0xf]
  %v167 = vld [vmem:[%s7] sm:$0x1]
  %v169 = vlaneseq
  %v170 = vshrl.u32 %v169, 7
  %v171 = vsub.s32 0, %v170
  %v172 = vrot.slane %v167, %v171
  %v178 = vunpack.c.l.b16 %v163
  %v179 = vunpack.c.l.b16 %v164
  %v180 = vunpack.c.l.b16 %v165
  %v181 = vunpack.c.l.b16 %v166
  %v182 = vpack.c.b16 %v179, %v178
  %v183 = vpack.c.b16 %v181, %v180
  %v187 = vsel %vm61, %v162, 0
  %189 = vmatprep.subr.bf16.mxu0 0
  %190 = vmatpush1.bf16.msra.mxu0 %v182
  %191 = vmatprep.subr.bf16.mxu0 0
  %192 = vmatpush1.bf16.msra.mxu0 %v183
  %193 = vmatprep.subr.bf16.mxu0 0
  %194 = vmatpush1.bf16.msra.mxu0 0
  %195 = vmatprep.subr.bf16.mxu0 0
  %196 = vmatpush1.bf16.msra.mxu0 0
  %197 = vmatprep.subr.bf16.mxu0 0
  %198 = vmatpush1.bf16.msra.mxu0 0
  %199 = vmatprep.subr.bf16.mxu0 0
  %200 = vmatpush1.bf16.msra.mxu0 0
  %201 = vmatprep.subr.bf16.mxu0 0
  %202 = vmatpush1.bf16.msra.mxu0 0
  %203 = vmatprep.subr.bf16.mxu0 0
  %204 = vmatpush1.bf16.msra.mxu0 0
  %205 = vmatprep.subr.bf16.mxu0 0
  %206 = vmatpush1.bf16.msra.mxu0 0
  %207 = vmatprep.subr.bf16.mxu0 0
  %208 = vmatpush1.bf16.msra.mxu0 0
  %209 = vmatprep.subr.bf16.mxu0 0
  %210 = vmatpush1.bf16.msra.mxu0 0
  %211 = vmatprep.subr.bf16.mxu0 0
  %212 = vmatpush1.bf16.msra.mxu0 0
  %213 = vmatprep.subr.bf16.mxu0 0
  %214 = vmatpush1.bf16.msra.mxu0 0
  %215 = vmatprep.subr.bf16.mxu0 0
  %216 = vmatpush1.bf16.msra.mxu0 0
  %217 = vmatprep.subr.bf16.mxu0 0
  %218 = vmatpush1.bf16.msra.mxu0 0
  %219 = vmatprep.subr.bf16.mxu0 0
  %220 = vmatpush1.bf16.msra.mxu0 0
  %221 = vmatprep.mubr.bf16.mxu0 0
  %222 = vmatmul.mubr.bf16.gmra.mrb[0].mxu0 %v187
  %v223 = vpop.f32.mrb[0].mxu0
  %v224 = vadd.f32 %v172, %v223
  %v225 = vpop.f32.mrb[0].mxu0
  %v226 = vpop.f32.mrb[0].mxu0
  %v227 = vadd.f32 %v172, %v226
  %v228 = vpop.f32.mrb[0].mxu0
  %229 = vdwg.mxu0
  %v230 = vmul.f32 %v224, 1.702
  %v231 = vmul.f32 %v227, 1.702
  %v232 = vxor.u32 %v230, 2147483648
  %v233 = vxor.u32 %v231, 2147483648
  %v234 = vmul.f32 %v232, 1.442695
  %v235 = vpow.pop %v234
  %v236 = vmul.f32 %v233, 1.442695
  %v237 = vpow.pop %v236
  %v238 = vadd.f32 %v235, 1.0
  %v239 = vadd.f32 %v237, 1.0
  %v240 = vrcp.pop %v238
  %v241 = vmul.f32 1.0, %v240
  %v242 = vrcp.pop %v239
  %v243 = vmul.f32 1.0, %v242
  %v244 = vmul.f32 %v224, %v241
  %v245 = vmul.f32 %v227, %v243
  %v246 = vpack.c.bf16 %v245, %v244
  %v247 = vld [vmem:[%s8] sm:$0xf]
  %v248 = vld [vmem:[%s8 + $0x4] sm:$0xf]
  %v249 = vld [vmem:[%s8 + $0x8] sm:$0xf]
  %v250 = vld [vmem:[%s8 + $0xc] sm:$0xf]
  %v251 = vld [vmem:[%s8 + $0x10] sm:$0xf]
  %v252 = vld [vmem:[%s8 + $0x14] sm:$0xf]
  %v253 = vld [vmem:[%s8 + $0x18] sm:$0xf]
  %v254 = vld [vmem:[%s8 + $0x1c] sm:$0xf]
  %v255 = vld [vmem:[%s8 + $0x20] sm:$0xf]
  %v256 = vld [vmem:[%s8 + $0x24] sm:$0xf]
  %v257 = vld [vmem:[%s8 + $0x28] sm:$0xf]
  %v258 = vld [vmem:[%s8 + $0x2c] sm:$0xf]
  %v259 = vld [vmem:[%s8 + $0x30] sm:$0xf]
  %v260 = vld [vmem:[%s8 + $0x34] sm:$0xf]
  %v261 = vld [vmem:[%s8 + $0x38] sm:$0xf]
  %v262 = vld [vmem:[%s8 + $0x3c] sm:$0xf]
  %v279 = vunpack.c.l.b16 %v247
  %v280 = vunpack.c.l.b16 %v248
  %v281 = vunpack.c.l.b16 %v249
  %v282 = vunpack.c.l.b16 %v250
  %v283 = vunpack.c.l.b16 %v251
  %v284 = vunpack.c.l.b16 %v252
  %v285 = vunpack.c.l.b16 %v253
  %v286 = vunpack.c.l.b16 %v254
  %v287 = vunpack.c.l.b16 %v255
  %v288 = vunpack.c.l.b16 %v256
  %v289 = vunpack.c.l.b16 %v257
  %v290 = vunpack.c.l.b16 %v258
  %v291 = vunpack.c.l.b16 %v259
  %v292 = vunpack.c.l.b16 %v260
  %v293 = vunpack.c.l.b16 %v261
  %v294 = vunpack.c.l.b16 %v262
  %v295 = vpack.c.b16 %v280, %v279
  %v296 = vpack.c.b16 %v282, %v281
  %v297 = vpack.c.b16 %v284, %v283
  %v298 = vpack.c.b16 %v286, %v285
  %v299 = vpack.c.b16 %v288, %v287
  %v300 = vpack.c.b16 %v290, %v289
  %v301 = vpack.c.b16 %v292, %v291
  %v302 = vpack.c.b16 %v294, %v293
  %311 = vmatprep.subr.bf16.mxu0 0
  %312 = vmatpush1.bf16.msra.mxu0 %v295
  %313 = vmatprep.subr.bf16.mxu0 0
  %314 = vmatpush1.bf16.msra.mxu0 %v296
  %315 = vmatprep.subr.bf16.mxu0 0
  %316 = vmatpush1.bf16.msra.mxu0 %v297
  %317 = vmatprep.subr.bf16.mxu0 0
  %318 = vmatpush1.bf16.msra.mxu0 %v298
  %319 = vmatprep.subr.bf16.mxu0 0
  %320 = vmatpush1.bf16.msra.mxu0 %v299
  %321 = vmatprep.subr.bf16.mxu0 0
  %322 = vmatpush1.bf16.msra.mxu0 %v300
  %323 = vmatprep.subr.bf16.mxu0 0
  %324 = vmatpush1.bf16.msra.mxu0 %v301
  %325 = vmatprep.subr.bf16.mxu0 0
  %326 = vmatpush1.bf16.msra.mxu0 %v302
  %327 = vmatprep.subr.bf16.mxu0 0
  %328 = vmatpush1.bf16.msra.mxu0 0
  %329 = vmatprep.subr.bf16.mxu0 0
  %330 = vmatpush1.bf16.msra.mxu0 0
  %331 = vmatprep.subr.bf16.mxu0 0
  %332 = vmatpush1.bf16.msra.mxu0 0
  %333 = vmatprep.subr.bf16.mxu0 0
  %334 = vmatpush1.bf16.msra.mxu0 0
  %335 = vmatprep.subr.bf16.mxu0 0
  %336 = vmatpush1.bf16.msra.mxu0 0
  %337 = vmatprep.subr.bf16.mxu0 0
  %338 = vmatpush1.bf16.msra.mxu0 0
  %339 = vmatprep.subr.bf16.mxu0 0
  %340 = vmatpush1.bf16.msra.mxu0 0
  %341 = vmatprep.subr.bf16.mxu0 0
  %342 = vmatpush1.bf16.msra.mxu0 0
  %343 = vmatprep.mubr.bf16.mxu0 0
  %344 = vmatmul.mubr.bf16.gmra.mrb[0].mxu0 %v246
  %v345 = vpop.f32.mrb[0].mxu0
  %v346 = vadd.f32 0.0, %v345
  %v347 = vpop.f32.mrb[0].mxu0
  %v348 = vpop.f32.mrb[0].mxu0
  %v349 = vadd.f32 0.0, %v348
  %v350 = vpop.f32.mrb[0].mxu0
  %351 = vdwg.mxu0
  %v352 = vadd.f32 %v115, %v346
  %v353 = vadd.f32 %v116, %v349
  %v354 = vld [vmem:[%s9] sm:$0x1]
  %v356 = vlaneseq
  %v357 = vshrl.u32 %v356, 7
  %v358 = vsub.s32 0, %v357
  %v359 = vrot.slane %v354, %v358
  %v361 = vadd.f32 %v352, %v359
  %v362 = vadd.f32 %v353, %v359
  %363 = vst.msk [vmem:[%s10] sm:$0xff] %vm61, %v361
  %364 = vst.msk [vmem:[%s10 + $0x8] sm:$0xff] %vm61, %v362
  // Predicated region
  $region42: #{_lambda_.8} parent=0 // pred_check
    _
  $region43: #{_lambda_.8} parent=0 // pred_check_branch
    %366 = sbr.rel (0) target = $region45
  $region44: #{_lambda_.8} parent=0 // pred_region
    _
  $region45: #{_lambda_.8} parent=0 // pred_fallthru
    _
  // Predicated region
  $region46: #{_lambda_.8} parent=0 // pred_check
    _
  $region47: #{_lambda_.8} parent=0 // pred_check_branch
    %368 = sbr.rel (0) target = $region49
  $region48: #{_lambda_.8} parent=0 // pred_region
    _
  $region49: #{_lambda_.8} parent=0 // pred_fallthru
    _

</llo_original>
